<compile_context>
chip_gen: v7x
topology: tpu7x:2x2x1
jax: 0.10.0
libtpu: 0.0.40
codegen_flags: <defaults>
</compile_context>

<pallas_src>
import math
import functools

import jax
import jax.numpy as jnp
from jax import lax
from jax.experimental import pallas as pl
from jax.experimental.pallas import tpu as pltpu


def _mha_kernel(q_ref, k_ref, v_ref,
                wq_ref, wk_ref, wv_ref, wo_ref,
                bq_ref, bk_ref, bv_ref, bo_ref,
                *rest, num_heads, d_k, compute_dtype, causal):
    # q_ref:   (1, tq, D)  query rows for this (batch, q-tile) grid step
    # k_ref:   (1, S,  D)  full keys   for this batch element
    # v_ref:   (1, S,  D)  full values for this batch element
    # w*_ref:  (D, D)      projection weights (D_in, D_out), compute dtype
    # b*_ref:  (1, D)      biases, f32
    # rest:    (mask_ref, out_ref) in the general-mask path, (out_ref,) if causal
    if causal:
        (out_ref,) = rest
        mask_ref = None
    else:
        mask_ref, out_ref = rest

    tq = q_ref.shape[1]
    skv = k_ref.shape[1]
    d_model = num_heads * d_k

    q = q_ref[0].astype(compute_dtype)           # (tq, D)
    k = k_ref[0].astype(compute_dtype)           # (S,  D)
    v = v_ref[0].astype(compute_dtype)           # (S,  D)

    scale = 1.0 / math.sqrt(d_k)

    # ---- Q/K/V projections: full-depth (D) MXU contractions, f32 accumulate.
    Q = (jnp.dot(q, wq_ref[...], preferred_element_type=jnp.float32)
         + bq_ref[...]) * scale                  # (tq, D) f32, 1/sqrt(d_k) folded in
    K = jnp.dot(k, wk_ref[...], preferred_element_type=jnp.float32) + bk_ref[...]
    V = jnp.dot(v, wv_ref[...], preferred_element_type=jnp.float32) + bv_ref[...]

    # ---- head split: one reshape + transpose (no per-head lane slices/stack).
    def heads(t, rows):
        return jnp.swapaxes(
            t.astype(compute_dtype).reshape(rows, num_heads, d_k), 0, 1)

    Qh = heads(Q, tq)                            # (H, tq, d_k)
    Kh = heads(K, skv)                           # (H, S,  d_k)
    Vh = heads(V, skv)                           # (H, S,  d_k)

    # ---- attention scores, batched over heads (flash-reference einsum form).
    s = jnp.einsum('hqd,hkd->hqk', Qh, Kh,
                   preferred_element_type=jnp.float32)   # (H, tq, S) f32

    # ---- mask: masked_fill(scores, mask == 0, -1e9), exactly like PyTorch
    # (fully-masked rows therefore softmax to uniform, matching the reference).
    if causal:
        q0 = pl.program_id(1) * tq
        row = q0 + lax.broadcasted_iota(jnp.int32, (tq, skv), 0)
        col = lax.broadcasted_iota(jnp.int32, (tq, skv), 1)
        keep = col <= row                        # (tq, S) generated in-kernel
    else:
        keep = mask_ref[0, 0] != 0               # (tq, S)
    s = jnp.where(keep[None, :, :], s, jnp.float32(-1e9))

    # ---- softmax in f32 (exact reciprocal on the f32 validation path).
    m = jnp.max(s, axis=-1, keepdims=True)
    e = jnp.exp(s - m)
    denom = jnp.sum(e, axis=-1, keepdims=True)
    p = e * pl.reciprocal(denom, approx=(compute_dtype != jnp.float32))

    ctx = jnp.einsum('hqk,hkd->hqd', p.astype(compute_dtype), Vh,
                     preferred_element_type=jnp.float32)  # (H, tq, d_k) f32

    # ---- output projection fused over heads:
    #   concat_h(ctx_h) @ W_o  as ONE (tq, D) x (D, D) MXU contraction.
    # The swap+reshape reproduces PyTorch's transpose(1,2).contiguous().view().
    ctx = jnp.swapaxes(ctx.astype(compute_dtype), 0, 1).reshape(tq, d_model)
    out = jnp.dot(ctx, wo_ref[...], preferred_element_type=jnp.float32) + bo_ref[...]
    out_ref[0] = out.astype(out_ref.dtype)


def prepare_params(params, compute_dtype=jnp.bfloat16):
    """Cast weights to the MXU compute dtype ONCE, outside the per-call path."""
    w = lambda a: jnp.asarray(a, compute_dtype)
    b = lambda a: jnp.asarray(a, jnp.float32)
    return {
        "wq": w(params["wq"]), "wk": w(params["wk"]),
        "wv": w(params["wv"]), "wo": w(params["wo"]),
        "bq": b(params["bq"]), "bk": b(params["bk"]),
        "bv": b(params["bv"]), "bo": b(params["bo"]),
    }


def _vmem_limit_bytes(need_bytes):
    """Generation-aware VMEM budget: clamp the per-call need to the chip's VMEM."""
    try:
        cap = int(getattr(pltpu.get_tpu_info(), "vmem_capacity_bytes", 128 << 20))
    except Exception:
        cap = 64 << 20          # conservative (v7x per-core VMEM)
    return int(min(max(need_bytes, 32 << 20), int(cap * 0.85)))


def multi_head_attention_pallas(q, k, v, mask, params, *, num_heads,
                                causal=False, q_tile=None):
    """q,k,v: (B,S,D); mask: (B,1,S,S) int (ignored if causal=True);
    params: weights (D_in, D_out) pre-cast to the compute dtype, biases (1, D) f32."""
    B, S, D = q.shape
    assert D % num_heads == 0
    d_k = D // num_heads
    compute_dtype = params["wq"].dtype           # set once by prepare_params

    # 256-row q tiles fill the 256-wide MXU on v6e/v7x; full S when smaller.
    if q_tile is None:
        q_tile = S if S <= 256 else 256
    assert S % q_tile == 0, "S must be divisible by q_tile"
    nq = S // q_tile

    kernel = functools.partial(
        _mha_kernel, num_heads=num_heads, d_k=d_k,
        compute_dtype=compute_dtype, causal=causal)

    in_specs = [
        pl.BlockSpec((1, q_tile, D), lambda b, i: (b, i, 0)),   # q (row-tiled)
        pl.BlockSpec((1, S, D), lambda b, i: (b, 0, 0)),        # k (full seq)
        pl.BlockSpec((1, S, D), lambda b, i: (b, 0, 0)),        # v (full seq)
        pl.BlockSpec((D, D), lambda b, i: (0, 0)),              # W_q (grid-invariant)
        pl.BlockSpec((D, D), lambda b, i: (0, 0)),              # W_k
        pl.BlockSpec((D, D), lambda b, i: (0, 0)),              # W_v
        pl.BlockSpec((D, D), lambda b, i: (0, 0)),              # W_o
        pl.BlockSpec((1, D), lambda b, i: (0, 0)),              # b_q
        pl.BlockSpec((1, D), lambda b, i: (0, 0)),              # b_k
        pl.BlockSpec((1, D), lambda b, i: (0, 0)),              # b_v
        pl.BlockSpec((1, D), lambda b, i: (0, 0)),              # b_o
    ]
    args = [q, k, v,
            params["wq"], params["wk"], params["wv"], params["wo"],
            params["bq"], params["bk"], params["bv"], params["bo"]]
    if not causal:
        assert mask is not None and mask.shape == (B, 1, S, S)
        in_specs.append(
            pl.BlockSpec((1, 1, q_tile, S), lambda b, i: (b, 0, i, 0)))  # mask
        args.append(mask)

    # ---- VMEM budget derived from the actual block sizes (double-buffered
    # inputs/outputs + f32 intermediates + headroom), clamped per generation.
    in_b = q.dtype.itemsize
    w_b = jnp.dtype(compute_dtype).itemsize
    block_bytes = (q_tile * D * in_b + 2 * S * D * in_b         # q, k, v blocks
                   + 4 * D * D * w_b + 4 * D * 4                # weights + biases
                   + q_tile * D * in_b)                         # out block
    if not causal:
        block_bytes += q_tile * S * mask.dtype.itemsize
    scratch_bytes = ((q_tile + 2 * S) * D * 4                   # f32 projections
                     + 3 * num_heads * q_tile * S * 4           # scores / exp / probs
                     + num_heads * q_tile * d_k * 4)            # ctx
    vmem_limit = _vmem_limit_bytes(2 * block_bytes + scratch_bytes + (4 << 20))

    cost = pl.CostEstimate(
        flops=4 * B * S * D * D * (nq + 1) + 4 * B * S * S * D,
        transcendentals=B * num_heads * S * S,
        bytes_accessed=sum(int(a.size) * a.dtype.itemsize for a in args)
                       + B * S * D * in_b,
    )

    return pl.pallas_call(
        kernel,
        out_shape=jax.ShapeDtypeStruct((B, S, D), q.dtype),
        grid_spec=pltpu.PrefetchScalarGridSpec(
            num_scalar_prefetch=0,
            grid=(B, nq),
            in_specs=in_specs,
            out_specs=pl.BlockSpec((1, q_tile, D), lambda b, i: (b, i, 0)),
        ),
        compiler_params=pltpu.CompilerParams(
            dimension_semantics=("parallel", "parallel"),
            vmem_limit_bytes=vmem_limit),
        cost_estimate=cost,
    )(*args)


def _reference(q, k, v, mask, params, num_heads):
    """Pure-JAX reference mirroring the PyTorch forward (dropout = identity)."""
    B, S, D = q.shape
    d_k = D // num_heads

    def lin(x, w, b):
        return x @ w + b[0]

    Q = lin(q, params["wq"], params["bq"]).reshape(B, S, num_heads, d_k).transpose(0, 2, 1, 3)
    K = lin(k, params["wk"], params["bk"]).reshape(B, S, num_heads, d_k).transpose(0, 2, 1, 3)
    V = lin(v, params["wv"], params["bv"]).reshape(B, S, num_heads, d_k).transpose(0, 2, 1, 3)

    scores = jnp.einsum("bhqd,bhkd->bhqk", Q, K) / math.sqrt(d_k)
    scores = jnp.where(mask == 0, -1e9, scores)
    attn = jax.nn.softmax(scores, axis=-1)
    x = jnp.einsum("bhqk,bhkd->bhqd", attn, V)
    x = x.transpose(0, 2, 1, 3).reshape(B, S, D)
    return lin(x, params["wo"], params["bo"])


if __name__ == "__main__":
    # Small but lane-dense shapes: D = 128 keeps the output tile unmasked
    # (d_model multiple of 128), d_k = 32, short sequence.
    B, S, D, H = 2, 16, 128, 4
    key = jax.random.PRNGKey(0)
    ks = jax.random.split(key, 12)

    bound = 1.0 / math.sqrt(D)   # PyTorch nn.Linear default uniform bound

    def w_init(kk):              # stored pre-transposed as (D_in, D_out)
        return jax.random.uniform(kk, (D, D), jnp.float32, -bound, bound)

    def b_init(kk):
        return jax.random.uniform(kk, (1, D), jnp.float32, -bound, bound)

    params = {
        "wq": w_init(ks[0]), "bq": b_init(ks[1]),
        "wk": w_init(ks[2]), "bk": b_init(ks[3]),
        "wv": w_init(ks[4]), "bv": b_init(ks[5]),
        "wo": w_init(ks[6]), "bo": b_init(ks[7]),
    }

    q = jax.random.normal(ks[8], (B, S, D), jnp.float32)
    k = jax.random.normal(ks[9], (B, S, D), jnp.float32)
    v = jax.random.normal(ks[10], (B, S, D), jnp.float32)

    # causal mask, (B, 1, S, S), 1 = keep, 0 = masked
    causal_mask = jnp.tril(jnp.ones((S, S), jnp.int32))
    mask = jnp.broadcast_to(causal_mask, (B, 1, S, S))

    ref = _reference(q, k, v, mask, params, H)

    # 1) f32 compute, explicit mask tensor (general-mask path): tight check.
    p_f32 = prepare_params(params, jnp.float32)
    out = jax.block_until_ready(
        multi_head_attention_pallas(q, k, v, mask, p_f32, num_heads=H))
    assert out.shape == (B, S, D)
    assert jnp.allclose(out, ref, atol=2e-3, rtol=2e-3), "f32 mask-path mismatch"

    # 2) f32 compute, in-kernel causal mask (no (B,S,S) tensor shipped from HBM).
    out_c = jax.block_until_ready(
        multi_head_attention_pallas(q, k, v, None, p_f32, num_heads=H, causal=True))
    assert jnp.allclose(out_c, ref, atol=2e-3, rtol=2e-3), "f32 causal-path mismatch"

    # 3) bf16 MXU inputs (perf default): f32 accumulate + f32 softmax.
    p_bf16 = prepare_params(params, jnp.bfloat16)
    out_b = jax.block_until_ready(
        multi_head_attention_pallas(q, k, v, None, p_bf16, num_heads=H, causal=True))
    assert out_b.shape == (B, S, D)
    assert jnp.allclose(out_b, ref, atol=5e-2, rtol=5e-2), "bf16 mismatch"

    print("KERNEL_OK")
</pallas_src>

<mosaic_0001>
module attributes {stable_mosaic.version = 11 : i64} {
  func.func @_mha_kernel(%arg0: i32, %arg1: i32, %arg2: memref<1x16x128xf32, #tpu.memory_space<vmem>>, %arg3: memref<1x16x128xf32, #tpu.memory_space<vmem>>, %arg4: memref<1x16x128xf32, #tpu.memory_space<vmem>>, %arg5: memref<128x128xf32, #tpu.memory_space<vmem>>, %arg6: memref<128x128xf32, #tpu.memory_space<vmem>>, %arg7: memref<128x128xf32, #tpu.memory_space<vmem>>, %arg8: memref<128x128xf32, #tpu.memory_space<vmem>>, %arg9: memref<1x128xf32, #tpu.memory_space<vmem>>, %arg10: memref<1x128xf32, #tpu.memory_space<vmem>>, %arg11: memref<1x128xf32, #tpu.memory_space<vmem>>, %arg12: memref<1x128xf32, #tpu.memory_space<vmem>>, %arg13: memref<1x1x16x16xi32, #tpu.memory_space<vmem>>, %arg14: memref<1x16x128xf32, #tpu.memory_space<vmem>>) attributes {dimension_semantics = [#tpu.dimension_semantics<parallel>, #tpu.dimension_semantics<parallel>], iteration_bounds = array<i64: 2, 1>, scalar_prefetch = 0 : i64, scratch_operands = 0 : i64, tpu.core_type = #tpu.core_type<tc>, window_params = [{transform_indices = @transform_0, window_bounds = array<i64: 1, 16, 128>}, {transform_indices = @transform_1, window_bounds = array<i64: 1, 16, 128>}, {transform_indices = @transform_2, window_bounds = array<i64: 1, 16, 128>}, {pipeline_mode = #tpu.pipeline_mode<synchronous>, transform_indices = @transform_3, window_bounds = array<i64: 128, 128>}, {pipeline_mode = #tpu.pipeline_mode<synchronous>, transform_indices = @transform_4, window_bounds = array<i64: 128, 128>}, {pipeline_mode = #tpu.pipeline_mode<synchronous>, transform_indices = @transform_5, window_bounds = array<i64: 128, 128>}, {pipeline_mode = #tpu.pipeline_mode<synchronous>, transform_indices = @transform_6, window_bounds = array<i64: 128, 128>}, {pipeline_mode = #tpu.pipeline_mode<synchronous>, transform_indices = @transform_7, window_bounds = array<i64: 1, 128>}, {pipeline_mode = #tpu.pipeline_mode<synchronous>, transform_indices = @transform_8, window_bounds = array<i64: 1, 128>}, {pipeline_mode = #tpu.pipeline_mode<synchronous>, transform_indices = @transform_9, window_bounds = array<i64: 1, 128>}, {pipeline_mode = #tpu.pipeline_mode<synchronous>, transform_indices = @transform_10, window_bounds = array<i64: 1, 128>}, {transform_indices = @transform_11, window_bounds = array<i64: 1, 1, 16, 16>}, {transform_indices = @transform_12, window_bounds = array<i64: 1, 16, 128>}]} {
    %c0 = arith.constant 0 : index
    %c0_0 = arith.constant 0 : index
    %c0_1 = arith.constant 0 : index
    %0 = vector.load %arg2[%c0, %c0_0, %c0_1] : memref<1x16x128xf32, #tpu.memory_space<vmem>>, vector<1x16x128xf32>
    %1 = vector.shape_cast %0 : vector<1x16x128xf32> to vector<16x128xf32>
    %c0_2 = arith.constant 0 : index
    %c0_3 = arith.constant 0 : index
    %c0_4 = arith.constant 0 : index
    %2 = vector.load %arg3[%c0_2, %c0_3, %c0_4] : memref<1x16x128xf32, #tpu.memory_space<vmem>>, vector<1x16x128xf32>
    %3 = vector.shape_cast %2 : vector<1x16x128xf32> to vector<16x128xf32>
    %c0_5 = arith.constant 0 : index
    %c0_6 = arith.constant 0 : index
    %c0_7 = arith.constant 0 : index
    %4 = vector.load %arg4[%c0_5, %c0_6, %c0_7] : memref<1x16x128xf32, #tpu.memory_space<vmem>>, vector<1x16x128xf32>
    %5 = vector.shape_cast %4 : vector<1x16x128xf32> to vector<16x128xf32>
    %c0_8 = arith.constant 0 : index
    %c0_9 = arith.constant 0 : index
    %6 = vector.load %arg5[%c0_8, %c0_9] : memref<128x128xf32, #tpu.memory_space<vmem>>, vector<128x128xf32>
    %cst = arith.constant dense<0.000000e+00> : vector<16x128xf32>
    %7 = tpu.matmul %1, %6, %cst {dimension_numbers = #tpu.dot_dimension_numbers<[1], [0], [0], [1], [0, 0, 1, 1], [], []>} : vector<16x128xf32>, vector<128x128xf32>, vector<16x128xf32> -> vector<16x128xf32>
    %c0_10 = arith.constant 0 : index
    %c0_11 = arith.constant 0 : index
    %8 = vector.load %arg9[%c0_10, %c0_11] : memref<1x128xf32, #tpu.memory_space<vmem>>, vector<1x128xf32>
    %9 = vector.broadcast %8 : vector<1x128xf32> to vector<16x128xf32>
    %10 = arith.addf %7, %9 : vector<16x128xf32>
    %cst_12 = arith.constant 0.176776692 : f32
    %11 = vector.broadcast %cst_12 : f32 to vector<16x128xf32>
    %12 = arith.mulf %10, %11 : vector<16x128xf32>
    %c0_13 = arith.constant 0 : index
    %c0_14 = arith.constant 0 : index
    %13 = vector.load %arg6[%c0_13, %c0_14] : memref<128x128xf32, #tpu.memory_space<vmem>>, vector<128x128xf32>
    %cst_15 = arith.constant dense<0.000000e+00> : vector<16x128xf32>
    %14 = tpu.matmul %3, %13, %cst_15 {dimension_numbers = #tpu.dot_dimension_numbers<[1], [0], [0], [1], [0, 0, 1, 1], [], []>} : vector<16x128xf32>, vector<128x128xf32>, vector<16x128xf32> -> vector<16x128xf32>
    %c0_16 = arith.constant 0 : index
    %c0_17 = arith.constant 0 : index
    %15 = vector.load %arg10[%c0_16, %c0_17] : memref<1x128xf32, #tpu.memory_space<vmem>>, vector<1x128xf32>
    %16 = vector.broadcast %15 : vector<1x128xf32> to vector<16x128xf32>
    %17 = arith.addf %14, %16 : vector<16x128xf32>
    %c0_18 = arith.constant 0 : index
    %c0_19 = arith.constant 0 : index
    %18 = vector.load %arg7[%c0_18, %c0_19] : memref<128x128xf32, #tpu.memory_space<vmem>>, vector<128x128xf32>
    %cst_20 = arith.constant dense<0.000000e+00> : vector<16x128xf32>
    %19 = tpu.matmul %5, %18, %cst_20 {dimension_numbers = #tpu.dot_dimension_numbers<[1], [0], [0], [1], [0, 0, 1, 1], [], []>} : vector<16x128xf32>, vector<128x128xf32>, vector<16x128xf32> -> vector<16x128xf32>
    %c0_21 = arith.constant 0 : index
    %c0_22 = arith.constant 0 : index
    %20 = vector.load %arg11[%c0_21, %c0_22] : memref<1x128xf32, #tpu.memory_space<vmem>>, vector<1x128xf32>
    %21 = vector.broadcast %20 : vector<1x128xf32> to vector<16x128xf32>
    %22 = arith.addf %19, %21 : vector<16x128xf32>
    %23 = vector.shape_cast %12 : vector<16x128xf32> to vector<16x4x32xf32>
    %24 = tpu.transpose %23, [1, 0, 2] : vector<16x4x32xf32> -> vector<4x16x32xf32>
    %25 = vector.shape_cast %17 : vector<16x128xf32> to vector<16x4x32xf32>
    %26 = tpu.transpose %25, [1, 0, 2] : vector<16x4x32xf32> -> vector<4x16x32xf32>
    %27 = vector.shape_cast %22 : vector<16x128xf32> to vector<16x4x32xf32>
    %28 = tpu.transpose %27, [1, 0, 2] : vector<16x4x32xf32> -> vector<4x16x32xf32>
    "tpu.trace_start"() <{level = 10 : i32, message = "hqd,hkd->hqk"}> : () -> ()
    %cst_23 = arith.constant dense<0.000000e+00> : vector<4x16x16xf32>
    %29 = tpu.matmul %24, %26, %cst_23 {dimension_numbers = #tpu.dot_dimension_numbers<[2], [2], [1], [1], [0, 0, 0, 1, 1, 1], [0], [0]>} : vector<4x16x32xf32>, vector<4x16x32xf32>, vector<4x16x16xf32> -> vector<4x16x16xf32>
    "tpu.trace_stop"() : () -> ()
    %c0_24 = arith.constant 0 : index
    %c0_25 = arith.constant 0 : index
    %c0_26 = arith.constant 0 : index
    %c0_27 = arith.constant 0 : index
    %30 = vector.load %arg13[%c0_24, %c0_25, %c0_26, %c0_27] : memref<1x1x16x16xi32, #tpu.memory_space<vmem>>, vector<1x1x16x16xi32>
    %31 = vector.shape_cast %30 : vector<1x1x16x16xi32> to vector<16x16xi32>
    %c0_i32 = arith.constant 0 : i32
    %32 = vector.broadcast %c0_i32 : i32 to vector<16x16xi32>
    %33 = arith.cmpi ne, %31, %32 : vector<16x16xi32>
    %34 = vector.shape_cast %33 : vector<16x16xi1> to vector<1x16x16xi1>
    %cst_28 = arith.constant -1.000000e+09 : f32
    %35 = vector.shape_cast %34 : vector<1x16x16xi1> to vector<1x16x16xi1>
    %36 = vector.broadcast %35 : vector<1x16x16xi1> to vector<4x16x16xi1>
    %37 = vector.broadcast %cst_28 : f32 to vector<4x16x16xf32>
    %38 = arith.select %36, %29, %37 : vector<4x16x16xi1>, vector<4x16x16xf32>
    %cst_29 = arith.constant dense<0xFF800000> : vector<4x16xf32>
    %39 = vector.multi_reduction <maximumf>, %38, %cst_29 [2] : vector<4x16x16xf32> to vector<4x16xf32>
    %40 = vector.shape_cast %39 : vector<4x16xf32> to vector<4x16x1xf32>
    %41 = vector.broadcast %40 : vector<4x16x1xf32> to vector<4x16x16xf32>
    %42 = arith.subf %38, %41 : vector<4x16x16xf32>
    %43 = math.exp %42 : vector<4x16x16xf32>
    %cst_30 = arith.constant dense<0.000000e+00> : vector<4x16xf32>
    %44 = vector.multi_reduction <add>, %43, %cst_30 [2] : vector<4x16x16xf32> to vector<4x16xf32>
    %45 = vector.shape_cast %44 : vector<4x16xf32> to vector<4x16x1xf32>
    %46 = tpu.reciprocal %45 : vector<4x16x1xf32> -> vector<4x16x1xf32>
    %47 = vector.broadcast %46 : vector<4x16x1xf32> to vector<4x16x16xf32>
    %48 = arith.mulf %43, %47 : vector<4x16x16xf32>
    "tpu.trace_start"() <{level = 10 : i32, message = "hqk,hkd->hqd"}> : () -> ()
    %cst_31 = arith.constant dense<0.000000e+00> : vector<4x16x32xf32>
    %49 = tpu.matmul %48, %28, %cst_31 {dimension_numbers = #tpu.dot_dimension_numbers<[2], [1], [1], [2], [0, 0, 0, 1, 1, 2], [0], [0]>} : vector<4x16x16xf32>, vector<4x16x32xf32>, vector<4x16x32xf32> -> vector<4x16x32xf32>
    "tpu.trace_stop"() : () -> ()
    %50 = tpu.transpose %49, [1, 0, 2] : vector<4x16x32xf32> -> vector<16x4x32xf32>
    %51 = vector.shape_cast %50 : vector<16x4x32xf32> to vector<16x128xf32>
    %c0_32 = arith.constant 0 : index
    %c0_33 = arith.constant 0 : index
    %52 = vector.load %arg8[%c0_32, %c0_33] : memref<128x128xf32, #tpu.memory_space<vmem>>, vector<128x128xf32>
    %cst_34 = arith.constant dense<0.000000e+00> : vector<16x128xf32>
    %53 = tpu.matmul %51, %52, %cst_34 {dimension_numbers = #tpu.dot_dimension_numbers<[1], [0], [0], [1], [0, 0, 1, 1], [], []>} : vector<16x128xf32>, vector<128x128xf32>, vector<16x128xf32> -> vector<16x128xf32>
    %c0_35 = arith.constant 0 : index
    %c0_36 = arith.constant 0 : index
    %54 = vector.load %arg12[%c0_35, %c0_36] : memref<1x128xf32, #tpu.memory_space<vmem>>, vector<1x128xf32>
    %55 = vector.broadcast %54 : vector<1x128xf32> to vector<16x128xf32>
    %56 = arith.addf %53, %55 : vector<16x128xf32>
    %c0_37 = arith.constant 0 : index
    %c0_38 = arith.constant 0 : index
    %c0_39 = arith.constant 0 : index
    %57 = vector.load %arg14[%c0_37, %c0_38, %c0_39] : memref<1x16x128xf32, #tpu.memory_space<vmem>>, vector<1x16x128xf32>
    %58 = vector.shape_cast %57 : vector<1x16x128xf32> to vector<16x128xf32>
    %59 = vector.shape_cast %56 : vector<16x128xf32> to vector<1x16x128xf32>
    tpu.vector_store %arg14[%c0_37, %c0_38, %c0_39], %59 {strides = array<i32>} : memref<1x16x128xf32, #tpu.memory_space<vmem>>, vector<1x16x128xf32>,
    return
  }
  func.func @transform_0(%arg0: i32, %arg1: i32) -> (i32, i32, i32) {
    %c0_i32 = arith.constant 0 : i32
    %c0_i32_0 = arith.constant 0 : i32
    return %arg0, %arg1, %c0_i32 : i32, i32, i32
  }
  func.func @transform_1(%arg0: i32, %arg1: i32) -> (i32, i32, i32) {
    %c0_i32 = arith.constant 0 : i32
    %c0_i32_0 = arith.constant 0 : i32
    %c0_i32_1 = arith.constant 0 : i32
    return %arg0, %c0_i32, %c0_i32_0 : i32, i32, i32
  }
  func.func @transform_2(%arg0: i32, %arg1: i32) -> (i32, i32, i32) {
    %c0_i32 = arith.constant 0 : i32
    %c0_i32_0 = arith.constant 0 : i32
    %c0_i32_1 = arith.constant 0 : i32
    return %arg0, %c0_i32, %c0_i32_0 : i32, i32, i32
  }
  func.func @transform_3(%arg0: i32, %arg1: i32) -> (i32, i32) {
    %c0_i32 = arith.constant 0 : i32
    %c0_i32_0 = arith.constant 0 : i32
    %c0_i32_1 = arith.constant 0 : i32
    return %c0_i32, %c0_i32_0 : i32, i32
  }
  func.func @transform_4(%arg0: i32, %arg1: i32) -> (i32, i32) {
    %c0_i32 = arith.constant 0 : i32
    %c0_i32_0 = arith.constant 0 : i32
    %c0_i32_1 = arith.constant 0 : i32
    return %c0_i32, %c0_i32_0 : i32, i32
  }
  func.func @transform_5(%arg0: i32, %arg1: i32) -> (i32, i32) {
    %c0_i32 = arith.constant 0 : i32
    %c0_i32_0 = arith.constant 0 : i32
    %c0_i32_1 = arith.constant 0 : i32
    return %c0_i32, %c0_i32_0 : i32, i32
  }
  func.func @transform_6(%arg0: i32, %arg1: i32) -> (i32, i32) {
    %c0_i32 = arith.constant 0 : i32
    %c0_i32_0 = arith.constant 0 : i32
    %c0_i32_1 = arith.constant 0 : i32
    return %c0_i32, %c0_i32_0 : i32, i32
  }
  func.func @transform_7(%arg0: i32, %arg1: i32) -> (i32, i32) {
    %c0_i32 = arith.constant 0 : i32
    %c0_i32_0 = arith.constant 0 : i32
    %c0_i32_1 = arith.constant 0 : i32
    return %c0_i32, %c0_i32_0 : i32, i32
  }
  func.func @transform_8(%arg0: i32, %arg1: i32) -> (i32, i32) {
    %c0_i32 = arith.constant 0 : i32
    %c0_i32_0 = arith.constant 0 : i32
    %c0_i32_1 = arith.constant 0 : i32
    return %c0_i32, %c0_i32_0 : i32, i32
  }
  func.func @transform_9(%arg0: i32, %arg1: i32) -> (i32, i32) {
    %c0_i32 = arith.constant 0 : i32
    %c0_i32_0 = arith.constant 0 : i32
    %c0_i32_1 = arith.constant 0 : i32
    return %c0_i32, %c0_i32_0 : i32, i32
  }
  func.func @transform_10(%arg0: i32, %arg1: i32) -> (i32, i32) {
    %c0_i32 = arith.constant 0 : i32
    %c0_i32_0 = arith.constant 0 : i32
    %c0_i32_1 = arith.constant 0 : i32
    return %c0_i32, %c0_i32_0 : i32, i32
  }
  func.func @transform_11(%arg0: i32, %arg1: i32) -> (i32, i32, i32, i32) {
    %c0_i32 = arith.constant 0 : i32
    %c0_i32_0 = arith.constant 0 : i32
    %c0_i32_1 = arith.constant 0 : i32
    return %arg0, %c0_i32, %arg1, %c0_i32_0 : i32, i32, i32, i32
  }
  func.func @transform_12(%arg0: i32, %arg1: i32) -> (i32, i32, i32) {
    %c0_i32 = arith.constant 0 : i32
    %c0_i32_0 = arith.constant 0 : i32
    return %arg0, %arg1, %c0_i32 : i32, i32, i32
  }
}

</mosaic_0001>

<llo_original>
// kernel: tpu_custom_call.1
$region0: #{tpu_custom_call.1}
  #allocation0 [shape = 'u32[]', space=smem, size = 0x4, offset = 0x4, fixed_abs, tag = 'smem constant byte address 0x4 - core index']
  #allocation1 [shape = 'u32[144,128]{1,0:T(1,128)}', space=vmem, size = 0x12000, scoped, tag = 'internal scratch']
  %s0 = inlined_call_operand.hbm [shape: f32[2,16,128], index: 0, kind: input, shape index: {}]
  %s1 = inlined_call_operand.hbm [shape: f32[2,16,128], index: 1, kind: input, shape index: {}]
  %s2 = inlined_call_operand.hbm [shape: f32[2,16,128], index: 2, kind: input, shape index: {}]
  %s3 = inlined_call_operand.hbm [shape: f32[128,128], index: 3, kind: input, shape index: {}]
  %s4 = inlined_call_operand.hbm [shape: f32[128,128], index: 4, kind: input, shape index: {}]
  %s5 = inlined_call_operand.hbm [shape: f32[128,128], index: 5, kind: input, shape index: {}]
  %s6 = inlined_call_operand.hbm [shape: f32[128,128], index: 6, kind: input, shape index: {}]
  %s7 = inlined_call_operand.vmem [shape: f32[1,128], index: 7, kind: input, shape index: {}]
  %s8 = inlined_call_operand.vmem [shape: f32[1,128], index: 8, kind: input, shape index: {}]
  %s9 = inlined_call_operand.vmem [shape: f32[1,128], index: 9, kind: input, shape index: {}]
  %s10 = inlined_call_operand.vmem [shape: f32[1,128], index: 10, kind: input, shape index: {}]
  %s11 = inlined_call_operand.vmem [shape: s32[2,1,16,16], index: 11, kind: input, shape index: {}]
  %s12 = inlined_call_operand.hbm [shape: f32[2,16,128], index: 12, kind: output, shape index: {}]
  %s13 = sld [smem:[#allocation0]]
  $region109: #{tpu_custom_call.1} parent=0
    _
  %s15 = ssub.s32 1, %s13
  %s16 = scalar_select 0, %s15, %s13
  $region1: #{tpu_custom_call.1} parent=0
    #allocation2 [shape = 'u8[16384]{0}', space=vmem, size = 0x4000, scoped, tag = 'input window, operand 0']
    #allocation3 [shape = 's32[2]{0}', space=sflag, size = 0x8, scoped, tag = 'scoped memory for tpu_custom_call.1']
    #allocation4 [shape = 's32[2]{0}', space=sflag, size = 0x8, scoped, tag = 'scoped memory for tpu_custom_call.1']
    #allocation5 [shape = 'u8[16384]{0}', space=vmem, size = 0x4000, scoped, tag = 'input window, operand 1']
    #allocation6 [shape = 's32[2]{0}', space=sflag, size = 0x8, scoped, tag = 'scoped memory for tpu_custom_call.1']
    #allocation7 [shape = 'u8[16384]{0}', space=vmem, size = 0x4000, scoped, tag = 'input window, operand 2']
    #allocation8 [shape = 'u8[65536]{0}', space=vmem, size = 0x10000, scoped, tag = 'input window, operand 3, single buffered']
    #allocation9 [shape = 's32[1]{0}', space=sflag, size = 0x4, scoped, tag = 'scoped memory for tpu_custom_call.1']
    #allocation10 [shape = 'u8[65536]{0}', space=vmem, size = 0x10000, scoped, tag = 'input window, operand 4, single buffered']
    #allocation11 [shape = 'u8[65536]{0}', space=vmem, size = 0x10000, scoped, tag = 'input window, operand 5, single buffered']
    #allocation12 [shape = 's32[1]{0}', space=sflag, size = 0x4, scoped, tag = 'scoped memory for tpu_custom_call.1']
    #allocation13 [shape = 'u8[65536]{0}', space=vmem, size = 0x10000, scoped, tag = 'input window, operand 6, single buffered']
    #allocation14 [shape = 'u8[16384]{0}', space=vmem, size = 0x4000, scoped, tag = 'output window, operand 0']
    %17 = vsyncpa [#allocation3], 0
    %s18 = scalar_lea.sflag [#allocation3], 1
    %19 = vsyncpa %s18, 0
    %20 = vsyncpa [#allocation6], 0
    %s21 = scalar_lea.sflag [#allocation6], 1
    %22 = vsyncpa %s21, 0
    %23 = vsyncpa [#allocation9], 0
    %24 = vsyncpa [#allocation12], 0
    %25 = vsyncpa [#allocation4], 0
    %s26 = scalar_lea.sflag [#allocation4], 1
    %27 = vsyncpa %s26, 0
    loop: start=0, step=1, limit=4
    $region2: #{tpu_custom_call.1} parent=1 // loop_pre_header
      _
    $region3: #{tpu_custom_call.1} parent=1 // loop_header
      %s29 = sphi 0, %s33
      %p30 = scmp.ge.s32.totalorder %s29, 4
      %s36 = sphi 0, %s48
      %s37 = sphi 0, %s44
      %s38 = sphi 0, %s36
      %s39 = sphi 0, %s37
      %s40 = sphi 0, %s38
      %s41 = sphi 0, %s39
      %s53 = sphi 0, %s55
      %s56 = sphi 0, %s53
      %s57 = sphi 0, %s56
      %s73 = sphi 0, %s57
      %s79 = sphi 0, %s81
      %s82 = sphi 0, %s79
      %s83 = sphi 0, %s82
      %s99 = sphi 0, %s83
      %s105 = sphi 0, %s107
      %s108 = sphi 0, %s105
      %s109 = sphi 0, %s108
      %s125 = sphi 0, %s109
      %s129 = sphi 0, %s129
      %s131 = sphi 0, %s129
      %s132 = sphi 0, %s131
      %s146 = sphi 0, %s132
      %s150 = sphi 0, %s150
      %s152 = sphi 0, %s150
      %s153 = sphi 0, %s152
      %s167 = sphi 0, %s153
      %s171 = sphi 0, %s171
      %s173 = sphi 0, %s171
      %s174 = sphi 0, %s173
      %s188 = sphi 0, %s174
      %s192 = sphi 0, %s192
      %s194 = sphi 0, %s192
      %s195 = sphi 0, %s194
      %s209 = sphi 0, %s195
      %s213 = sphi 0, %s213
      %s215 = sphi 0, %s213
      %s216 = sphi 0, %s215
      %s230 = sphi 0, %s216
      %s234 = sphi 0, %s234
      %s236 = sphi 0, %s234
      %s237 = sphi 0, %s236
      %s251 = sphi 0, %s237
      %s255 = sphi 0, %s255
      %s257 = sphi 0, %s255
      %s258 = sphi 0, %s257
      %s272 = sphi 0, %s258
      %s276 = sphi 0, %s276
      %s278 = sphi 0, %s276
      %s279 = sphi 0, %s278
      %s293 = sphi 0, %s279
      %s301 = sphi 0, %s303
      %s304 = sphi 0, %s301
      %s305 = sphi 0, %s304
      %s321 = sphi 0, %s305
      %s329 = sphi 0, %s331
      %s332 = sphi 0, %s329
      %s333 = sphi 0, %s332
      %s349 = sphi 0, %s333
    $region4: #{tpu_custom_call.1} parent=1 // loop_header_branch
      %32 = sbr.rel (%p30) target = $region8
    $region5: #{tpu_custom_call.1} parent=1 // loop_body
      %s34 = ssub.s32 %s29, 1
      %s35 = ssub.s32 %s29, 2
      %s42 = sadd.s32 1, %s37
      %p43 = scmp.ge.s32.totalorder %s42, 1
      %s44 = scalar_select %p43, 0, %s42
      %s45 = sadd.s32 1, %s36
      %s46 = scalar_select %p43, %s45, %s36
      %p47 = scmp.ge.s32.totalorder %s46, 2
      %s48 = scalar_select %p47, 0, %s46
      %s49 = ssub.s32 %s36, %s48
      %s50 = ssub.s32 %s37, %s44
      %s51 = sor.u32 %s49, %s50
      %p52 = scmp.eq.s32.totalorder %s51, 0
      %s54 = sadd.s32 %s53, 1
      %s55 = scalar_select %p52, %s53, %s54
      %p58 = pneg %p52
      %p59 = scmp.eq.s32.totalorder %s29, 1
      %p60 = por %p58, %p59
      %p61 = scmp.ne.s32.totalorder %s53, %s56
      %p62 = scmp.eq.s32.totalorder %s29, 0
      %p63 = por %p61, %p62
      %p64 = scmp.ne.s32.totalorder %s53, %s56
      %p65 = scmp.eq.s32.totalorder %s34, 1
      %p66 = por %p64, %p65
      %p67 = scmp.ne.s32.totalorder %s56, %s57
      %p68 = scmp.eq.s32.totalorder %s34, 0
      %p69 = por %p67, %p68
      %p70 = scmp.ne.s32.totalorder %s56, %s57
      %p71 = scmp.eq.s32.totalorder %s35, 1
      %p72 = por %p70, %p71
      %p74 = scmp.ne.s32.totalorder %s57, %s73
      %p75 = scmp.eq.s32.totalorder %s35, 0
      %p76 = por %p74, %p75
      %s77 = ssub.s32 %s36, %s48
      %p78 = scmp.eq.s32.totalorder %s77, 0
      %s80 = sadd.s32 %s79, 1
      %s81 = scalar_select %p78, %s79, %s80
      %p84 = pneg %p78
      %p85 = scmp.eq.s32.totalorder %s29, 1
      %p86 = por %p84, %p85
      %p87 = scmp.ne.s32.totalorder %s79, %s82
      %p88 = scmp.eq.s32.totalorder %s29, 0
      %p89 = por %p87, %p88
      %p90 = scmp.ne.s32.totalorder %s79, %s82
      %p91 = scmp.eq.s32.totalorder %s34, 1
      %p92 = por %p90, %p91
      %p93 = scmp.ne.s32.totalorder %s82, %s83
      %p94 = scmp.eq.s32.totalorder %s34, 0
      %p95 = por %p93, %p94
      %p96 = scmp.ne.s32.totalorder %s82, %s83
      %p97 = scmp.eq.s32.totalorder %s35, 1
      %p98 = por %p96, %p97
      %p100 = scmp.ne.s32.totalorder %s83, %s99
      %p101 = scmp.eq.s32.totalorder %s35, 0
      %p102 = por %p100, %p101
      %s103 = ssub.s32 %s36, %s48
      %p104 = scmp.eq.s32.totalorder %s103, 0
      %s106 = sadd.s32 %s105, 1
      %s107 = scalar_select %p104, %s105, %s106
      %p110 = pneg %p104
      %p111 = scmp.eq.s32.totalorder %s29, 1
      %p112 = por %p110, %p111
      %p113 = scmp.ne.s32.totalorder %s105, %s108
      %p114 = scmp.eq.s32.totalorder %s29, 0
      %p115 = por %p113, %p114
      %p116 = scmp.ne.s32.totalorder %s105, %s108
      %p117 = scmp.eq.s32.totalorder %s34, 1
      %p118 = por %p116, %p117
      %p119 = scmp.ne.s32.totalorder %s108, %s109
      %p120 = scmp.eq.s32.totalorder %s34, 0
      %p121 = por %p119, %p120
      %p122 = scmp.ne.s32.totalorder %s108, %s109
      %p123 = scmp.eq.s32.totalorder %s35, 1
      %p124 = por %p122, %p123
      %p126 = scmp.ne.s32.totalorder %s109, %s125
      %p127 = scmp.eq.s32.totalorder %s35, 0
      %p128 = por %p126, %p127
      %s130 = sadd.s32 %s129, 1
      %p133 = scmp.eq.s32.totalorder %s29, 1
      %p134 = scmp.ne.s32.totalorder %s129, %s131
      %p135 = scmp.eq.s32.totalorder %s29, 0
      %p136 = por %p134, %p135
      %p137 = scmp.ne.s32.totalorder %s129, %s131
      %p138 = scmp.eq.s32.totalorder %s34, 1
      %p139 = por %p137, %p138
      %p140 = scmp.ne.s32.totalorder %s131, %s132
      %p141 = scmp.eq.s32.totalorder %s34, 0
      %p142 = por %p140, %p141
      %p143 = scmp.ne.s32.totalorder %s131, %s132
      %p144 = scmp.eq.s32.totalorder %s35, 1
      %p145 = por %p143, %p144
      %p147 = scmp.ne.s32.totalorder %s132, %s146
      %p148 = scmp.eq.s32.totalorder %s35, 0
      %p149 = por %p147, %p148
      %s151 = sadd.s32 %s150, 1
      %p154 = scmp.eq.s32.totalorder %s29, 1
      %p155 = scmp.ne.s32.totalorder %s150, %s152
      %p156 = scmp.eq.s32.totalorder %s29, 0
      %p157 = por %p155, %p156
      %p158 = scmp.ne.s32.totalorder %s150, %s152
      %p159 = scmp.eq.s32.totalorder %s34, 1
      %p160 = por %p158, %p159
      %p161 = scmp.ne.s32.totalorder %s152, %s153
      %p162 = scmp.eq.s32.totalorder %s34, 0
      %p163 = por %p161, %p162
      %p164 = scmp.ne.s32.totalorder %s152, %s153
      %p165 = scmp.eq.s32.totalorder %s35, 1
      %p166 = por %p164, %p165
      %p168 = scmp.ne.s32.totalorder %s153, %s167
      %p169 = scmp.eq.s32.totalorder %s35, 0
      %p170 = por %p168, %p169
      %s172 = sadd.s32 %s171, 1
      %p175 = scmp.eq.s32.totalorder %s29, 1
      %p176 = scmp.ne.s32.totalorder %s171, %s173
      %p177 = scmp.eq.s32.totalorder %s29, 0
      %p178 = por %p176, %p177
      %p179 = scmp.ne.s32.totalorder %s171, %s173
      %p180 = scmp.eq.s32.totalorder %s34, 1
      %p181 = por %p179, %p180
      %p182 = scmp.ne.s32.totalorder %s173, %s174
      %p183 = scmp.eq.s32.totalorder %s34, 0
      %p184 = por %p182, %p183
      %p185 = scmp.ne.s32.totalorder %s173, %s174
      %p186 = scmp.eq.s32.totalorder %s35, 1
      %p187 = por %p185, %p186
      %p189 = scmp.ne.s32.totalorder %s174, %s188
      %p190 = scmp.eq.s32.totalorder %s35, 0
      %p191 = por %p189, %p190
      %s193 = sadd.s32 %s192, 1
      %p196 = scmp.eq.s32.totalorder %s29, 1
      %p197 = scmp.ne.s32.totalorder %s192, %s194
      %p198 = scmp.eq.s32.totalorder %s29, 0
      %p199 = por %p197, %p198
      %p200 = scmp.ne.s32.totalorder %s192, %s194
      %p201 = scmp.eq.s32.totalorder %s34, 1
      %p202 = por %p200, %p201
      %p203 = scmp.ne.s32.totalorder %s194, %s195
      %p204 = scmp.eq.s32.totalorder %s34, 0
      %p205 = por %p203, %p204
      %p206 = scmp.ne.s32.totalorder %s194, %s195
      %p207 = scmp.eq.s32.totalorder %s35, 1
      %p208 = por %p206, %p207
      %p210 = scmp.ne.s32.totalorder %s195, %s209
      %p211 = scmp.eq.s32.totalorder %s35, 0
      %p212 = por %p210, %p211
      %s214 = sadd.s32 %s213, 1
      %p217 = scmp.eq.s32.totalorder %s29, 1
      %p218 = scmp.ne.s32.totalorder %s213, %s215
      %p219 = scmp.eq.s32.totalorder %s29, 0
      %p220 = por %p218, %p219
      %p221 = scmp.ne.s32.totalorder %s213, %s215
      %p222 = scmp.eq.s32.totalorder %s34, 1
      %p223 = por %p221, %p222
      %p224 = scmp.ne.s32.totalorder %s215, %s216
      %p225 = scmp.eq.s32.totalorder %s34, 0
      %p226 = por %p224, %p225
      %p227 = scmp.ne.s32.totalorder %s215, %s216
      %p228 = scmp.eq.s32.totalorder %s35, 1
      %p229 = por %p227, %p228
      %p231 = scmp.ne.s32.totalorder %s216, %s230
      %p232 = scmp.eq.s32.totalorder %s35, 0
      %p233 = por %p231, %p232
      %s235 = sadd.s32 %s234, 1
      %p238 = scmp.eq.s32.totalorder %s29, 1
      %p239 = scmp.ne.s32.totalorder %s234, %s236
      %p240 = scmp.eq.s32.totalorder %s29, 0
      %p241 = por %p239, %p240
      %p242 = scmp.ne.s32.totalorder %s234, %s236
      %p243 = scmp.eq.s32.totalorder %s34, 1
      %p244 = por %p242, %p243
      %p245 = scmp.ne.s32.totalorder %s236, %s237
      %p246 = scmp.eq.s32.totalorder %s34, 0
      %p247 = por %p245, %p246
      %p248 = scmp.ne.s32.totalorder %s236, %s237
      %p249 = scmp.eq.s32.totalorder %s35, 1
      %p250 = por %p248, %p249
      %p252 = scmp.ne.s32.totalorder %s237, %s251
      %p253 = scmp.eq.s32.totalorder %s35, 0
      %p254 = por %p252, %p253
      %s256 = sadd.s32 %s255, 1
      %p259 = scmp.eq.s32.totalorder %s29, 1
      %p260 = scmp.ne.s32.totalorder %s255, %s257
      %p261 = scmp.eq.s32.totalorder %s29, 0
      %p262 = por %p260, %p261
      %p263 = scmp.ne.s32.totalorder %s255, %s257
      %p264 = scmp.eq.s32.totalorder %s34, 1
      %p265 = por %p263, %p264
      %p266 = scmp.ne.s32.totalorder %s257, %s258
      %p267 = scmp.eq.s32.totalorder %s34, 0
      %p268 = por %p266, %p267
      %p269 = scmp.ne.s32.totalorder %s257, %s258
      %p270 = scmp.eq.s32.totalorder %s35, 1
      %p271 = por %p269, %p270
      %p273 = scmp.ne.s32.totalorder %s258, %s272
      %p274 = scmp.eq.s32.totalorder %s35, 0
      %p275 = por %p273, %p274
      %s277 = sadd.s32 %s276, 1
      %p280 = scmp.eq.s32.totalorder %s29, 1
      %p281 = scmp.ne.s32.totalorder %s276, %s278
      %p282 = scmp.eq.s32.totalorder %s29, 0
      %p283 = por %p281, %p282
      %p284 = scmp.ne.s32.totalorder %s276, %s278
      %p285 = scmp.eq.s32.totalorder %s34, 1
      %p286 = por %p284, %p285
      %p287 = scmp.ne.s32.totalorder %s278, %s279
      %p288 = scmp.eq.s32.totalorder %s34, 0
      %p289 = por %p287, %p288
      %p290 = scmp.ne.s32.totalorder %s278, %s279
      %p291 = scmp.eq.s32.totalorder %s35, 1
      %p292 = por %p290, %p291
      %p294 = scmp.ne.s32.totalorder %s279, %s293
      %p295 = scmp.eq.s32.totalorder %s35, 0
      %p296 = por %p294, %p295
      %s297 = ssub.s32 %s36, %s48
      %s298 = ssub.s32 %s37, %s44
      %s299 = sor.u32 %s297, %s298
      %p300 = scmp.eq.s32.totalorder %s299, 0
      %s302 = sadd.s32 %s301, 1
      %s303 = scalar_select %p300, %s301, %s302
      %p306 = pneg %p300
      %p307 = scmp.eq.s32.totalorder %s29, 1
      %p308 = por %p306, %p307
      %p309 = scmp.ne.s32.totalorder %s301, %s304
      %p310 = scmp.eq.s32.totalorder %s29, 0
      %p311 = por %p309, %p310
      %p312 = scmp.ne.s32.totalorder %s301, %s304
      %p313 = scmp.eq.s32.totalorder %s34, 1
      %p314 = por %p312, %p313
      %p315 = scmp.ne.s32.totalorder %s304, %s305
      %p316 = scmp.eq.s32.totalorder %s34, 0
      %p317 = por %p315, %p316
      %p318 = scmp.ne.s32.totalorder %s304, %s305
      %p319 = scmp.eq.s32.totalorder %s35, 1
      %p320 = por %p318, %p319
      %p322 = scmp.ne.s32.totalorder %s305, %s321
      %p323 = scmp.eq.s32.totalorder %s35, 0
      %p324 = por %p322, %p323
      %s325 = ssub.s32 %s36, %s48
      %s326 = ssub.s32 %s37, %s44
      %s327 = sor.u32 %s325, %s326
      %p328 = scmp.eq.s32.totalorder %s327, 0
      %s330 = sadd.s32 %s329, 1
      %s331 = scalar_select %p328, %s329, %s330
      %p334 = pneg %p328
      %p335 = scmp.eq.s32.totalorder %s29, 1
      %p336 = por %p334, %p335
      %p337 = scmp.ne.s32.totalorder %s329, %s332
      %p338 = scmp.eq.s32.totalorder %s29, 0
      %p339 = por %p337, %p338
      %p340 = scmp.ne.s32.totalorder %s329, %s332
      %p341 = scmp.eq.s32.totalorder %s34, 1
      %p342 = por %p340, %p341
      %p343 = scmp.ne.s32.totalorder %s332, %s333
      %p344 = scmp.eq.s32.totalorder %s34, 0
      %p345 = por %p343, %p344
      %p346 = scmp.ne.s32.totalorder %s332, %s333
      %p347 = scmp.eq.s32.totalorder %s35, 1
      %p348 = por %p346, %p347
      %p350 = scmp.ne.s32.totalorder %s333, %s349
      %p351 = scmp.eq.s32.totalorder %s35, 0
      %p352 = por %p350, %p351
      %p353 = scmp.le.s32.totalorder 1, %s29
      %p354 = scmp.lt.s32.totalorder %s29, 3
      %p355 = pnand %p353, %p354
      %p356 = pneg %p355
      // Predicated region
      $region9: #{tpu_custom_call.1} parent=5 // pred_check
        _
      $region10: #{tpu_custom_call.1} parent=5 // pred_check_branch
        %358 = sbr.rel (%p355) target = $region12
      $region11: #{tpu_custom_call.1} parent=5 // pred_region
        %s359 = ssub.s32 %s29, 1
        // Predicated region
        $region13: #{tpu_custom_call.1} parent=11 // pred_check
          %p360 = pneg %p142
        $region14: #{tpu_custom_call.1} parent=11 // pred_check_branch
          %362 = sbr.rel (%p360) target = $region16
        $region15: #{tpu_custom_call.1} parent=11 // pred_region
          %s364 = ssub.s32 2048, 2048
          %365 = vsyncadd [#allocation9], %s364
          %s366 = sshll.u32 [#allocation8], 4
          %s367 = int_to_ptr.vmem [resolvable:$true] %s366
          %372 = dma.hbm_to_vmem [thread:$0]  %s3, 2048, %s367, [#allocation9], 128, 128, 8
        $region16: #{tpu_custom_call.1} parent=11 // pred_fallthru
          _
        // Predicated region
        $region17: #{tpu_custom_call.1} parent=11 // pred_check
          %p373 = pneg %p163
        $region18: #{tpu_custom_call.1} parent=11 // pred_check_branch
          %375 = sbr.rel (%p373) target = $region20
        $region19: #{tpu_custom_call.1} parent=11 // pred_region
          %s377 = ssub.s32 2048, 2048
          %378 = vsyncadd [#allocation9], %s377
          %s379 = sshll.u32 [#allocation10], 4
          %s380 = int_to_ptr.vmem [resolvable:$true] %s379
          %385 = dma.hbm_to_vmem [thread:$0]  %s4, 2048, %s380, [#allocation9], 128, 128, 8
        $region20: #{tpu_custom_call.1} parent=11 // pred_fallthru
          _
        // Predicated region
        $region21: #{tpu_custom_call.1} parent=11 // pred_check
          %p386 = pneg %p184
        $region22: #{tpu_custom_call.1} parent=11 // pred_check_branch
          %388 = sbr.rel (%p386) target = $region24
        $region23: #{tpu_custom_call.1} parent=11 // pred_region
          %s390 = ssub.s32 2048, 2048
          %391 = vsyncadd [#allocation12], %s390
          %s392 = sshll.u32 [#allocation11], 4
          %s393 = int_to_ptr.vmem [resolvable:$true] %s392
          %398 = dma.hbm_to_vmem [thread:$0]  %s5, 2048, %s393, [#allocation12], 128, 128, 8
        $region24: #{tpu_custom_call.1} parent=11 // pred_fallthru
          _
        // Predicated region
        $region25: #{tpu_custom_call.1} parent=11 // pred_check
          %p399 = pneg %p205
        $region26: #{tpu_custom_call.1} parent=11 // pred_check_branch
          %401 = sbr.rel (%p399) target = $region28
        $region27: #{tpu_custom_call.1} parent=11 // pred_region
          %s403 = ssub.s32 2048, 2048
          %404 = vsyncadd [#allocation12], %s403
          %s405 = sshll.u32 [#allocation13], 4
          %s406 = int_to_ptr.vmem [resolvable:$true] %s405
          %411 = dma.hbm_to_vmem [thread:$0]  %s6, 2048, %s406, [#allocation12], 128, 128, 8
        $region28: #{tpu_custom_call.1} parent=11 // pred_fallthru
          _
        // Predicated region
        $region29: #{tpu_custom_call.1} parent=11 // pred_check
          %p412 = pneg %p226
        $region30: #{tpu_custom_call.1} parent=11 // pred_check_branch
          %414 = sbr.rel (%p412) target = $region32
        $region31: #{tpu_custom_call.1} parent=11 // pred_region
          _
        $region32: #{tpu_custom_call.1} parent=11 // pred_fallthru
          _
        // Predicated region
        $region33: #{tpu_custom_call.1} parent=11 // pred_check
          %p415 = pneg %p247
        $region34: #{tpu_custom_call.1} parent=11 // pred_check_branch
          %417 = sbr.rel (%p415) target = $region36
        $region35: #{tpu_custom_call.1} parent=11 // pred_region
          _
        $region36: #{tpu_custom_call.1} parent=11 // pred_fallthru
          _
        // Predicated region
        $region37: #{tpu_custom_call.1} parent=11 // pred_check
          %p418 = pneg %p268
        $region38: #{tpu_custom_call.1} parent=11 // pred_check_branch
          %420 = sbr.rel (%p418) target = $region40
        $region39: #{tpu_custom_call.1} parent=11 // pred_region
          _
        $region40: #{tpu_custom_call.1} parent=11 // pred_fallthru
          _
        // Predicated region
        $region41: #{tpu_custom_call.1} parent=11 // pred_check
          %p421 = pneg %p289
        $region42: #{tpu_custom_call.1} parent=11 // pred_check_branch
          %423 = sbr.rel (%p421) target = $region44
        $region43: #{tpu_custom_call.1} parent=11 // pred_region
          _
        $region44: #{tpu_custom_call.1} parent=11 // pred_fallthru
          _
      $region12: #{tpu_custom_call.1} parent=5 // pred_fallthru
        _
      %p424 = scmp.lt.s32.totalorder %s29, 2
      // Predicated region
      $region45: #{tpu_custom_call.1} parent=5 // pred_check
        %p425 = pneg %p424
      $region46: #{tpu_custom_call.1} parent=5 // pred_check_branch
        %427 = sbr.rel (%p425) target = $region48
      $region47: #{tpu_custom_call.1} parent=5 // pred_region
        // Predicated region
        $region49: #{tpu_custom_call.1} parent=47 // pred_check
          %p428 = pneg %p63
        $region50: #{tpu_custom_call.1} parent=47 // pred_check_branch
          %430 = sbr.rel (%p428) target = $region52
        $region51: #{tpu_custom_call.1} parent=47 // pred_region
          %s431 = sand.u32 %s53, 1
          %s432 = scalar_lea.sflag [#allocation3], %s431
          %s433 = sand.u32 %s53, 1
          %s434 = smul.addr %s433, 16
          %s435 = scalar_lea.vmem [#allocation2], %s434
          %s436 = smul.u32 2, %s37
          %s438 = ssub.s32 256, 256
          %439 = vsyncadd %s432, %s438
          %s440 = smul.addr %s36, 2
          %s441 = sadd.s32 %s436, %s440
          %s442 = smul.addr %s441, 128
          %s443 = scalar_lea.hbm %s0, %s442
          %s444 = sshll.u32 %s435, 4
          %s445 = int_to_ptr.vmem [resolvable:$true] %s444
          %450 = dma.hbm_to_vmem [thread:$0]  %s443, 256, %s445, %s432, 128, 128, 8
        $region52: #{tpu_custom_call.1} parent=47 // pred_fallthru
          _
        // Predicated region
        $region53: #{tpu_custom_call.1} parent=47 // pred_check
          %p451 = pneg %p89
        $region54: #{tpu_custom_call.1} parent=47 // pred_check_branch
          %453 = sbr.rel (%p451) target = $region56
        $region55: #{tpu_custom_call.1} parent=47 // pred_region
          %s454 = sand.u32 %s29, 1
          %s455 = scalar_lea.sflag [#allocation6], %s454
          %s456 = sand.u32 %s79, 1
          %s457 = smul.addr %s456, 16
          %s458 = scalar_lea.vmem [#allocation5], %s457
          %s460 = ssub.s32 256, 256
          %461 = vsyncadd %s455, %s460
          %s462 = smul.addr %s36, 2
          %s463 = smul.addr %s462, 128
          %s464 = scalar_lea.hbm %s1, %s463
          %s465 = sshll.u32 %s458, 4
          %s466 = int_to_ptr.vmem [resolvable:$true] %s465
          %471 = dma.hbm_to_vmem [thread:$0]  %s464, 256, %s466, %s455, 128, 128, 8
        $region56: #{tpu_custom_call.1} parent=47 // pred_fallthru
          _
        // Predicated region
        $region57: #{tpu_custom_call.1} parent=47 // pred_check
          %p472 = pneg %p115
        $region58: #{tpu_custom_call.1} parent=47 // pred_check_branch
          %474 = sbr.rel (%p472) target = $region60
        $region59: #{tpu_custom_call.1} parent=47 // pred_region
          %s475 = sand.u32 %s29, 1
          %s476 = scalar_lea.sflag [#allocation6], %s475
          %s477 = sand.u32 %s105, 1
          %s478 = smul.addr %s477, 16
          %s479 = scalar_lea.vmem [#allocation7], %s478
          %s481 = ssub.s32 256, 256
          %482 = vsyncadd %s476, %s481
          %s483 = smul.addr %s36, 2
          %s484 = smul.addr %s483, 128
          %s485 = scalar_lea.hbm %s2, %s484
          %s486 = sshll.u32 %s479, 4
          %s487 = int_to_ptr.vmem [resolvable:$true] %s486
          %492 = dma.hbm_to_vmem [thread:$0]  %s485, 256, %s487, %s476, 128, 128, 8
        $region60: #{tpu_custom_call.1} parent=47 // pred_fallthru
          _
        // Predicated region
        $region61: #{tpu_custom_call.1} parent=47 // pred_check
          %p493 = pneg %p311
        $region62: #{tpu_custom_call.1} parent=47 // pred_check_branch
          %495 = sbr.rel (%p493) target = $region64
        $region63: #{tpu_custom_call.1} parent=47 // pred_region
          %s496 = smul.u32 2, %s37
          %p497 = scmp.lt.s32.totalorder %s36, 1
          %s498 = scalar_select %p497, %s36, 1
          %p499 = scmp.lt.s32.totalorder %s496, 1
          %s500 = scalar_select %p499, %s496, 1
          %s501 = smul.addr %s498, 2
          %s502 = sadd.s32 %s500, %s501
          %s503 = smul.addr %s502, 8
          %s504 = scalar_lea.vmem %s11, %s503
          %s505 = smul.u32 2, %s37
        $region64: #{tpu_custom_call.1} parent=47 // pred_fallthru
          _
      $region48: #{tpu_custom_call.1} parent=5 // pred_fallthru
        _
      %p506 = scmp.le.s32.totalorder 1, %s29
      %p507 = scmp.lt.s32.totalorder %s29, 3
      %p508 = pnand %p506, %p507
      %p509 = pneg %p508
      // Predicated region
      $region65: #{tpu_custom_call.1} parent=5 // pred_check
        _
      $region66: #{tpu_custom_call.1} parent=5 // pred_check_branch
        %511 = sbr.rel (%p508) target = $region68
      $region67: #{tpu_custom_call.1} parent=5 // pred_region
        %s512 = ssub.s32 %s29, 1
        %s513 = sand.u32 %s56, 1
        %s514 = scalar_lea.sflag [#allocation3], %s513
        %s515 = sand.u32 %s56, 1
        %s516 = smul.addr %s515, 16
        %s517 = scalar_lea.vmem [#allocation2], %s516
        // Predicated region
        $region69: #{tpu_custom_call.1} parent=67 // pred_check
          %p518 = pneg %p69
        $region70: #{tpu_custom_call.1} parent=67 // pred_check_branch
          %520 = sbr.rel (%p518) target = $region72
        $region71: #{tpu_custom_call.1} parent=67 // pred_region
          %521 = dma.done %s514, 256
        $region72: #{tpu_custom_call.1} parent=67 // pred_fallthru
          _
        %s522 = sand.u32 %s34, 1
        %s523 = scalar_lea.sflag [#allocation6], %s522
        %s524 = sand.u32 %s82, 1
        %s525 = smul.addr %s524, 16
        %s526 = scalar_lea.vmem [#allocation5], %s525
        // Predicated region
        $region73: #{tpu_custom_call.1} parent=67 // pred_check
          %p527 = pneg %p95
        $region74: #{tpu_custom_call.1} parent=67 // pred_check_branch
          %529 = sbr.rel (%p527) target = $region76
        $region75: #{tpu_custom_call.1} parent=67 // pred_region
          %530 = dma.done %s523, 256
        $region76: #{tpu_custom_call.1} parent=67 // pred_fallthru
          _
        %s531 = sand.u32 %s34, 1
        %s532 = scalar_lea.sflag [#allocation6], %s531
        %s533 = sand.u32 %s108, 1
        %s534 = smul.addr %s533, 16
        %s535 = scalar_lea.vmem [#allocation7], %s534
        // Predicated region
        $region77: #{tpu_custom_call.1} parent=67 // pred_check
          %p536 = pneg %p121
        $region78: #{tpu_custom_call.1} parent=67 // pred_check_branch
          %538 = sbr.rel (%p536) target = $region80
        $region79: #{tpu_custom_call.1} parent=67 // pred_region
          %539 = dma.done %s532, 256
        $region80: #{tpu_custom_call.1} parent=67 // pred_fallthru
          _
        // Predicated region
        $region81: #{tpu_custom_call.1} parent=67 // pred_check
          %p540 = pneg %p142
        $region82: #{tpu_custom_call.1} parent=67 // pred_check_branch
          %542 = sbr.rel (%p540) target = $region84
        $region83: #{tpu_custom_call.1} parent=67 // pred_region
          %543 = dma.done [#allocation9], 2048
        $region84: #{tpu_custom_call.1} parent=67 // pred_fallthru
          _
        // Predicated region
        $region85: #{tpu_custom_call.1} parent=67 // pred_check
          %p544 = pneg %p163
        $region86: #{tpu_custom_call.1} parent=67 // pred_check_branch
          %546 = sbr.rel (%p544) target = $region88
        $region87: #{tpu_custom_call.1} parent=67 // pred_region
          %547 = dma.done [#allocation9], 2048
        $region88: #{tpu_custom_call.1} parent=67 // pred_fallthru
          _
        // Predicated region
        $region89: #{tpu_custom_call.1} parent=67 // pred_check
          %p548 = pneg %p184
        $region90: #{tpu_custom_call.1} parent=67 // pred_check_branch
          %550 = sbr.rel (%p548) target = $region92
        $region91: #{tpu_custom_call.1} parent=67 // pred_region
          %551 = dma.done [#allocation12], 2048
        $region92: #{tpu_custom_call.1} parent=67 // pred_fallthru
          _
        // Predicated region
        $region93: #{tpu_custom_call.1} parent=67 // pred_check
          %p552 = pneg %p205
        $region94: #{tpu_custom_call.1} parent=67 // pred_check_branch
          %554 = sbr.rel (%p552) target = $region96
        $region95: #{tpu_custom_call.1} parent=67 // pred_region
          %555 = dma.done [#allocation12], 2048
        $region96: #{tpu_custom_call.1} parent=67 // pred_fallthru
          _
        %s556 = sand.u32 %s56, 1
        %s557 = scalar_lea.sflag [#allocation3], %s556
        %s558 = sand.u32 %s56, 1
        %s559 = smul.addr %s558, 16
        %s560 = scalar_lea.vmem [#allocation2], %s559
        %p561 = pneg %p69
        %p562 = pneg %p66
        %s563 = sand.u32 %s34, 1
        %s564 = scalar_lea.sflag [#allocation6], %s563
        %s565 = sand.u32 %s82, 1
        %s566 = smul.addr %s565, 16
        %s567 = scalar_lea.vmem [#allocation5], %s566
        %p568 = pneg %p95
        %p569 = pneg %p92
        %s570 = sand.u32 %s34, 1
        %s571 = scalar_lea.sflag [#allocation6], %s570
        %s572 = sand.u32 %s108, 1
        %s573 = smul.addr %s572, 16
        %s574 = scalar_lea.vmem [#allocation7], %s573
        %p575 = pneg %p121
        %p576 = pneg %p118
        %p577 = pneg %p142
        %p578 = pneg %p139
        %p579 = pneg %p163
        %p580 = pneg %p160
        %p581 = pneg %p184
        %p582 = pneg %p181
        %p583 = pneg %p205
        %p584 = pneg %p202
        %p585 = pneg %p226
        %p586 = pneg %p223
        %p587 = pneg %p247
        %p588 = pneg %p244
        %p589 = pneg %p268
        %p590 = pneg %p265
        %p591 = pneg %p289
        %p592 = pneg %p286
        %s593 = smul.u32 2, %s39
        %p594 = scmp.lt.s32.totalorder %s38, 1
        %s595 = scalar_select %p594, %s38, 1
        %p596 = scmp.lt.s32.totalorder %s593, 1
        %s597 = scalar_select %p596, %s593, 1
        %s598 = smul.addr %s595, 2
        %s599 = sadd.s32 %s597, %s598
        %s600 = smul.addr %s599, 8
        %s601 = scalar_lea.vmem %s11, %s600
        %p602 = pneg %p317
        %p603 = pneg %p314
        %p604 = pneg %p345
        %p605 = pneg %p342
        %s606 = sand.u32 %s332, 1
        %s607 = scalar_lea.sflag [#allocation4], %s606
        %s608 = sand.u32 %s332, 1
        %s609 = smul.addr %s608, 16
        %s610 = scalar_lea.vmem [#allocation14], %s609
        %s611 = smul.u32 2, %s39
        %s612 = smul.u32 2, %s39
        %p613 = scmp.lt.s32.totalorder %s38, 1
        %s614 = scalar_select %p613, %s38, 1
        %p615 = scmp.lt.s32.totalorder %s612, 1
        %s616 = scalar_select %p615, %s612, 1
        %s617 = smul.addr %s614, 2
        %s618 = sadd.s32 %s616, %s617
        %s619 = smul.addr %s618, 8
        %s620 = scalar_lea.vmem %s11, %s619
        %s621 = smul.u32 2, %s39
        %s622 = smul.u32 2, %s39
        %v623 = vld [vmem:[%s517] sm:$0xff]
        %v624 = vld [vmem:[%s517 + $0x8] sm:$0xff]
        %v625 = vld [vmem:[%s526] sm:$0xff]
        %v626 = vld [vmem:[%s526 + $0x8] sm:$0xff]
        %v627 = vld [vmem:[%s535] sm:$0xff]
        %v628 = vld [vmem:[%s535 + $0x8] sm:$0xff]
        %v629 = vld [vmem:[#allocation8] sm:$0xff]
        %v630 = vld [vmem:[#allocation8 + $0x8] sm:$0xff]
        %v631 = vld [vmem:[#allocation8 + $0x10] sm:$0xff]
        %v632 = vld [vmem:[#allocation8 + $0x18] sm:$0xff]
        %v633 = vld [vmem:[#allocation8 + $0x20] sm:$0xff]
        %v634 = vld [vmem:[#allocation8 + $0x28] sm:$0xff]
        %v635 = vld [vmem:[#allocation8 + $0x30] sm:$0xff]
        %v636 = vld [vmem:[#allocation8 + $0x38] sm:$0xff]
        %v637 = vld [vmem:[#allocation8 + $0x40] sm:$0xff]
        %v638 = vld [vmem:[#allocation8 + $0x48] sm:$0xff]
        %v639 = vld [vmem:[#allocation8 + $0x50] sm:$0xff]
        %v640 = vld [vmem:[#allocation8 + $0x58] sm:$0xff]
        %v641 = vld [vmem:[#allocation8 + $0x60] sm:$0xff]
        %v642 = vld [vmem:[#allocation8 + $0x68] sm:$0xff]
        %v643 = vld [vmem:[#allocation8 + $0x70] sm:$0xff]
        %v644 = vld [vmem:[#allocation8 + $0x78] sm:$0xff]
        %v645 = vld [vmem:[%s7] sm:$0x1]
        %v647 = vlaneseq
        %v648 = vshrl.u32 %v647, 7
        %v649 = vsub.s32 0, %v648
        %v650 = vrot.slane %v645, %v649
        %652 = vmatprep.subr.mxu0 0.0
        %653 = vmatpush1.msra.mxu0 %v629
        %654 = vmatprep.subr.mxu0 0.0
        %655 = vmatpush1.msra.mxu0 %v630
        %656 = vmatprep.subr.mxu0 0.0
        %657 = vmatpush1.msra.mxu0 %v631
        %658 = vmatprep.subr.mxu0 0.0
        %659 = vmatpush1.msra.mxu0 %v632
        %660 = vmatprep.subr.mxu0 0.0
        %661 = vmatpush1.msra.mxu0 %v633
        %662 = vmatprep.subr.mxu0 0.0
        %663 = vmatpush1.msra.mxu0 %v634
        %664 = vmatprep.subr.mxu0 0.0
        %665 = vmatpush1.msra.mxu0 %v635
        %666 = vmatprep.subr.mxu0 0.0
        %667 = vmatpush1.msra.mxu0 %v636
        %668 = vmatprep.subr.mxu0 0.0
        %669 = vmatpush1.msra.mxu0 %v637
        %670 = vmatprep.subr.mxu0 0.0
        %671 = vmatpush1.msra.mxu0 %v638
        %672 = vmatprep.subr.mxu0 0.0
        %673 = vmatpush1.msra.mxu0 %v639
        %674 = vmatprep.subr.mxu0 0.0
        %675 = vmatpush1.msra.mxu0 %v640
        %676 = vmatprep.subr.mxu0 0.0
        %677 = vmatpush1.msra.mxu0 %v641
        %678 = vmatprep.subr.mxu0 0.0
        %679 = vmatpush1.msra.mxu0 %v642
        %680 = vmatprep.subr.mxu0 0.0
        %681 = vmatpush1.msra.mxu0 %v643
        %682 = vmatprep.subr.mxu0 0.0
        %683 = vmatpush1.msra.mxu0 %v644
        %684 = vmatprep.subr.mxu0 0.0
        %685 = vmatpush1.msra.mxu0 0.0
        %686 = vmatprep.subr.mxu0 0.0
        %687 = vmatpush1.msra.mxu0 0.0
        %688 = vmatprep.subr.mxu0 0.0
        %689 = vmatpush1.msra.mxu0 0.0
        %690 = vmatprep.subr.mxu0 0.0
        %691 = vmatpush1.msra.mxu0 0.0
        %692 = vmatprep.subr.mxu0 0.0
        %693 = vmatpush1.msra.mxu0 0.0
        %694 = vmatprep.subr.mxu0 0.0
        %695 = vmatpush1.msra.mxu0 0.0
        %696 = vmatprep.subr.mxu0 0.0
        %697 = vmatpush1.msra.mxu0 0.0
        %698 = vmatprep.subr.mxu0 0.0
        %699 = vmatpush1.msra.mxu0 0.0
        %700 = vmatprep.subr.mxu0 0.0
        %701 = vmatpush1.msra.mxu0 0.0
        %702 = vmatprep.subr.mxu0 0.0
        %703 = vmatpush1.msra.mxu0 0.0
        %704 = vmatprep.subr.mxu0 0.0
        %705 = vmatpush1.msra.mxu0 0.0
        %706 = vmatprep.subr.mxu0 0.0
        %707 = vmatpush1.msra.mxu0 0.0
        %708 = vmatprep.subr.mxu0 0.0
        %709 = vmatpush1.msra.mxu0 0.0
        %710 = vmatprep.subr.mxu0 0.0
        %711 = vmatpush1.msra.mxu0 0.0
        %712 = vmatprep.subr.mxu0 0.0
        %713 = vmatpush1.msra.mxu0 0.0
        %714 = vmatprep.subr.mxu0 0.0
        %715 = vmatpush1.msra.mxu0 0.0
        %716 = vmatprep.mubr.f32.mxu0 0.0
        %717 = vmatmul.mubr.f32.gmra.mrb[0].mxu0 %v623
        %v718 = vpop.f32.mrb[0].mxu0
        %v719 = vadd.f32 %v650, %v718
        %v720 = vpop.f32.mrb[0].mxu0
        %721 = vmatprep.mubr.f32.mxu0 0.0
        %722 = vmatmul.mubr.f32.gmra.mrb[0].mxu0 %v624
        %v723 = vpop.f32.mrb[0].mxu0
        %v724 = vadd.f32 %v650, %v723
        %v725 = vpop.f32.mrb[0].mxu0
        %726 = vdwg.mxu0
        %v727 = vmul.f32 %v719, 0.17677669
        %v728 = vmul.f32 %v724, 0.17677669
        %v729 = vld [vmem:[#allocation10] sm:$0xff]
        %v730 = vld [vmem:[#allocation10 + $0x8] sm:$0xff]
        %v731 = vld [vmem:[#allocation10 + $0x10] sm:$0xff]
        %v732 = vld [vmem:[#allocation10 + $0x18] sm:$0xff]
        %v733 = vld [vmem:[#allocation10 + $0x20] sm:$0xff]
        %v734 = vld [vmem:[#allocation10 + $0x28] sm:$0xff]
        %v735 = vld [vmem:[#allocation10 + $0x30] sm:$0xff]
        %v736 = vld [vmem:[#allocation10 + $0x38] sm:$0xff]
        %v737 = vld [vmem:[#allocation10 + $0x40] sm:$0xff]
        %v738 = vld [vmem:[#allocation10 + $0x48] sm:$0xff]
        %v739 = vld [vmem:[#allocation10 + $0x50] sm:$0xff]
        %v740 = vld [vmem:[#allocation10 + $0x58] sm:$0xff]
        %v741 = vld [vmem:[#allocation10 + $0x60] sm:$0xff]
        %v742 = vld [vmem:[#allocation10 + $0x68] sm:$0xff]
        %v743 = vld [vmem:[#allocation10 + $0x70] sm:$0xff]
        %v744 = vld [vmem:[#allocation10 + $0x78] sm:$0xff]
        %v745 = vld [vmem:[%s8] sm:$0x1]
        %v747 = vlaneseq
        %v748 = vshrl.u32 %v747, 7
        %v749 = vsub.s32 0, %v748
        %v750 = vrot.slane %v745, %v749
        %752 = vmatprep.subr.mxu0 0.0
        %753 = vmatpush1.msra.mxu0 %v729
        %754 = vmatprep.subr.mxu0 0.0
        %755 = vmatpush1.msra.mxu0 %v730
        %756 = vmatprep.subr.mxu0 0.0
        %757 = vmatpush1.msra.mxu0 %v731
        %758 = vmatprep.subr.mxu0 0.0
        %759 = vmatpush1.msra.mxu0 %v732
        %760 = vmatprep.subr.mxu0 0.0
        %761 = vmatpush1.msra.mxu0 %v733
        %762 = vmatprep.subr.mxu0 0.0
        %763 = vmatpush1.msra.mxu0 %v734
        %764 = vmatprep.subr.mxu0 0.0
        %765 = vmatpush1.msra.mxu0 %v735
        %766 = vmatprep.subr.mxu0 0.0
        %767 = vmatpush1.msra.mxu0 %v736
        %768 = vmatprep.subr.mxu0 0.0
        %769 = vmatpush1.msra.mxu0 %v737
        %770 = vmatprep.subr.mxu0 0.0
        %771 = vmatpush1.msra.mxu0 %v738
        %772 = vmatprep.subr.mxu0 0.0
        %773 = vmatpush1.msra.mxu0 %v739
        %774 = vmatprep.subr.mxu0 0.0
        %775 = vmatpush1.msra.mxu0 %v740
        %776 = vmatprep.subr.mxu0 0.0
        %777 = vmatpush1.msra.mxu0 %v741
        %778 = vmatprep.subr.mxu0 0.0
        %779 = vmatpush1.msra.mxu0 %v742
        %780 = vmatprep.subr.mxu0 0.0
        %781 = vmatpush1.msra.mxu0 %v743
        %782 = vmatprep.subr.mxu0 0.0
        %783 = vmatpush1.msra.mxu0 %v744
        %784 = vmatprep.subr.mxu0 0.0
        %785 = vmatpush1.msra.mxu0 0.0
        %786 = vmatprep.subr.mxu0 0.0
        %787 = vmatpush1.msra.mxu0 0.0
        %788 = vmatprep.subr.mxu0 0.0
        %789 = vmatpush1.msra.mxu0 0.0
        %790 = vmatprep.subr.mxu0 0.0
        %791 = vmatpush1.msra.mxu0 0.0
        %792 = vmatprep.subr.mxu0 0.0
        %793 = vmatpush1.msra.mxu0 0.0
        %794 = vmatprep.subr.mxu0 0.0
        %795 = vmatpush1.msra.mxu0 0.0
        %796 = vmatprep.subr.mxu0 0.0
        %797 = vmatpush1.msra.mxu0 0.0
        %798 = vmatprep.subr.mxu0 0.0
        %799 = vmatpush1.msra.mxu0 0.0
        %800 = vmatprep.subr.mxu0 0.0
        %801 = vmatpush1.msra.mxu0 0.0
        %802 = vmatprep.subr.mxu0 0.0
        %803 = vmatpush1.msra.mxu0 0.0
        %804 = vmatprep.subr.mxu0 0.0
        %805 = vmatpush1.msra.mxu0 0.0
        %806 = vmatprep.subr.mxu0 0.0
        %807 = vmatpush1.msra.mxu0 0.0
        %808 = vmatprep.subr.mxu0 0.0
        %809 = vmatpush1.msra.mxu0 0.0
        %810 = vmatprep.subr.mxu0 0.0
        %811 = vmatpush1.msra.mxu0 0.0
        %812 = vmatprep.subr.mxu0 0.0
        %813 = vmatpush1.msra.mxu0 0.0
        %814 = vmatprep.subr.mxu0 0.0
        %815 = vmatpush1.msra.mxu0 0.0
        %816 = vmatprep.mubr.f32.mxu0 0.0
        %817 = vmatmul.mubr.f32.gmra.mrb[0].mxu0 %v625
        %v818 = vpop.f32.mrb[0].mxu0
        %v819 = vadd.f32 %v750, %v818
        %v820 = vpop.f32.mrb[0].mxu0
        %821 = vmatprep.mubr.f32.mxu0 0.0
        %822 = vmatmul.mubr.f32.gmra.mrb[0].mxu0 %v626
        %v823 = vpop.f32.mrb[0].mxu0
        %v824 = vadd.f32 %v750, %v823
        %v825 = vpop.f32.mrb[0].mxu0
        %826 = vdwg.mxu0
        %v827 = vld [vmem:[#allocation11] sm:$0xff]
        %v828 = vld [vmem:[#allocation11 + $0x8] sm:$0xff]
        %v829 = vld [vmem:[#allocation11 + $0x10] sm:$0xff]
        %v830 = vld [vmem:[#allocation11 + $0x18] sm:$0xff]
        %v831 = vld [vmem:[#allocation11 + $0x20] sm:$0xff]
        %v832 = vld [vmem:[#allocation11 + $0x28] sm:$0xff]
        %v833 = vld [vmem:[#allocation11 + $0x30] sm:$0xff]
        %v834 = vld [vmem:[#allocation11 + $0x38] sm:$0xff]
        %v835 = vld [vmem:[#allocation11 + $0x40] sm:$0xff]
        %v836 = vld [vmem:[#allocation11 + $0x48] sm:$0xff]
        %v837 = vld [vmem:[#allocation11 + $0x50] sm:$0xff]
        %v838 = vld [vmem:[#allocation11 + $0x58] sm:$0xff]
        %v839 = vld [vmem:[#allocation11 + $0x60] sm:$0xff]
        %v840 = vld [vmem:[#allocation11 + $0x68] sm:$0xff]
        %v841 = vld [vmem:[#allocation11 + $0x70] sm:$0xff]
        %v842 = vld [vmem:[#allocation11 + $0x78] sm:$0xff]
        %v843 = vld [vmem:[%s9] sm:$0x1]
        %v845 = vlaneseq
        %v846 = vshrl.u32 %v845, 7
        %v847 = vsub.s32 0, %v846
        %v848 = vrot.slane %v843, %v847
        %850 = vmatprep.subr.mxu0 0.0
        %851 = vmatpush1.msra.mxu0 %v827
        %852 = vmatprep.subr.mxu0 0.0
        %853 = vmatpush1.msra.mxu0 %v828
        %854 = vmatprep.subr.mxu0 0.0
        %855 = vmatpush1.msra.mxu0 %v829
        %856 = vmatprep.subr.mxu0 0.0
        %857 = vmatpush1.msra.mxu0 %v830
        %858 = vmatprep.subr.mxu0 0.0
        %859 = vmatpush1.msra.mxu0 %v831
        %860 = vmatprep.subr.mxu0 0.0
        %861 = vmatpush1.msra.mxu0 %v832
        %862 = vmatprep.subr.mxu0 0.0
        %863 = vmatpush1.msra.mxu0 %v833
        %864 = vmatprep.subr.mxu0 0.0
        %865 = vmatpush1.msra.mxu0 %v834
        %866 = vmatprep.subr.mxu0 0.0
        %867 = vmatpush1.msra.mxu0 %v835
        %868 = vmatprep.subr.mxu0 0.0
        %869 = vmatpush1.msra.mxu0 %v836
        %870 = vmatprep.subr.mxu0 0.0
        %871 = vmatpush1.msra.mxu0 %v837
        %872 = vmatprep.subr.mxu0 0.0
        %873 = vmatpush1.msra.mxu0 %v838
        %874 = vmatprep.subr.mxu0 0.0
        %875 = vmatpush1.msra.mxu0 %v839
        %876 = vmatprep.subr.mxu0 0.0
        %877 = vmatpush1.msra.mxu0 %v840
        %878 = vmatprep.subr.mxu0 0.0
        %879 = vmatpush1.msra.mxu0 %v841
        %880 = vmatprep.subr.mxu0 0.0
        %881 = vmatpush1.msra.mxu0 %v842
        %882 = vmatprep.subr.mxu0 0.0
        %883 = vmatpush1.msra.mxu0 0.0
        %884 = vmatprep.subr.mxu0 0.0
        %885 = vmatpush1.msra.mxu0 0.0
        %886 = vmatprep.subr.mxu0 0.0
        %887 = vmatpush1.msra.mxu0 0.0
        %888 = vmatprep.subr.mxu0 0.0
        %889 = vmatpush1.msra.mxu0 0.0
        %890 = vmatprep.subr.mxu0 0.0
        %891 = vmatpush1.msra.mxu0 0.0
        %892 = vmatprep.subr.mxu0 0.0
        %893 = vmatpush1.msra.mxu0 0.0
        %894 = vmatprep.subr.mxu0 0.0
        %895 = vmatpush1.msra.mxu0 0.0
        %896 = vmatprep.subr.mxu0 0.0
        %897 = vmatpush1.msra.mxu0 0.0
        %898 = vmatprep.subr.mxu0 0.0
        %899 = vmatpush1.msra.mxu0 0.0
        %900 = vmatprep.subr.mxu0 0.0
        %901 = vmatpush1.msra.mxu0 0.0
        %902 = vmatprep.subr.mxu0 0.0
        %903 = vmatpush1.msra.mxu0 0.0
        %904 = vmatprep.subr.mxu0 0.0
        %905 = vmatpush1.msra.mxu0 0.0
        %906 = vmatprep.subr.mxu0 0.0
        %907 = vmatpush1.msra.mxu0 0.0
        %908 = vmatprep.subr.mxu0 0.0
        %909 = vmatpush1.msra.mxu0 0.0
        %910 = vmatprep.subr.mxu0 0.0
        %911 = vmatpush1.msra.mxu0 0.0
        %912 = vmatprep.subr.mxu0 0.0
        %913 = vmatpush1.msra.mxu0 0.0
        %914 = vmatprep.mubr.f32.mxu0 0.0
        %915 = vmatmul.mubr.f32.gmra.mrb[0].mxu0 %v627
        %v916 = vpop.f32.mrb[0].mxu0
        %v917 = vadd.f32 %v848, %v916
        %v918 = vpop.f32.mrb[0].mxu0
        %919 = vmatprep.mubr.f32.mxu0 0.0
        %920 = vmatmul.mubr.f32.gmra.mrb[0].mxu0 %v628
        %v921 = vpop.f32.mrb[0].mxu0
        %v922 = vadd.f32 %v848, %v921
        %v923 = vpop.f32.mrb[0].mxu0
        %924 = vdwg.mxu0
        %927 = vrot.lane.b32.xlu0 %v727, 96
        %v928 = vpop.permute.xlu0 %927
        %929 = vrot.lane.b32.xlu0 %v728, 96
        %v930 = vpop.permute.xlu0 %929
        %933 = vrot.lane.b32.xlu0 %v727, 64
        %v934 = vpop.permute.xlu0 %933
        %935 = vrot.lane.b32.xlu0 %v728, 64
        %v936 = vpop.permute.xlu0 %935
        %939 = vrot.lane.b32.xlu0 %v727, 32
        %v940 = vpop.permute.xlu0 %939
        %941 = vrot.lane.b32.xlu0 %v728, 32
        %v942 = vpop.permute.xlu0 %941
        %v945 = vcombine.low %v727, %v934
        %v946 = vcombine.high %v727, %v934
        %v948 = vunpack.c.l.s4 1983009808
        %v949 = vunpack.c.0.s8 %v948
        %v950 = vlaneseq
        %v951 = vshrl.u32 %v950, 7
        %v952 = vsub.s32 %v949, %v951
        %v953 = vrot.slane %v945, %v952
        %v955 = vunpack.c.l.s4 1983009808
        %v956 = vunpack.c.0.s8 %v955
        %v957 = vlaneseq
        %v958 = vshrl.u32 %v957, 7
        %v959 = vsub.s32 %v956, %v958
        %v960 = vrot.slane %v946, %v959
        %v961 = vcombine.low %v928, %v940
        %v962 = vcombine.high %v928, %v940
        %v964 = vunpack.c.l.s4 1983009808
        %v965 = vunpack.c.0.s8 %v964
        %v966 = vlaneseq
        %v967 = vshrl.u32 %v966, 7
        %v968 = vsub.s32 %v965, %v967
        %v969 = vrot.slane %v961, %v968
        %v971 = vunpack.c.l.s4 1983009808
        %v972 = vunpack.c.0.s8 %v971
        %v973 = vlaneseq
        %v974 = vshrl.u32 %v973, 7
        %v975 = vsub.s32 %v972, %v974
        %v976 = vrot.slane %v962, %v975
        %v977 = vcombine.low %v953, %v969
        %v978 = vcombine.high %v953, %v969
        %v980 = vunpack.c.l.s4 1934713408
        %v981 = vunpack.c.0.s8 %v980
        %v982 = vlaneseq
        %v983 = vshrl.u32 %v982, 7
        %v984 = vsub.s32 %v981, %v983
        %v985 = vrot.slane %v977, %v984
        %v987 = vunpack.c.l.s4 1934713408
        %v988 = vunpack.c.0.s8 %v987
        %v989 = vlaneseq
        %v990 = vshrl.u32 %v989, 7
        %v991 = vsub.s32 %v988, %v990
        %v992 = vrot.slane %v978, %v991
        %v993 = vcombine.low %v960, %v976
        %v994 = vcombine.high %v960, %v976
        %v996 = vunpack.c.l.s4 1934713408
        %v997 = vunpack.c.0.s8 %v996
        %v998 = vlaneseq
        %v999 = vshrl.u32 %v998, 7
        %v1000 = vsub.s32 %v997, %v999
        %v1001 = vrot.slane %v993, %v1000
        %v1003 = vunpack.c.l.s4 1934713408
        %v1004 = vunpack.c.0.s8 %v1003
        %v1005 = vlaneseq
        %v1006 = vshrl.u32 %v1005, 7
        %v1007 = vsub.s32 %v1004, %v1006
        %v1008 = vrot.slane %v994, %v1007
        %v1009 = vcombine.high %v985, 0.0
        %v1010 = vcombine.high %v992, 0.0
        %v1011 = vcombine.high %v1001, 0.0
        %v1012 = vcombine.high %v1008, 0.0
        %v1013 = vcombine.low %v728, %v936
        %v1014 = vcombine.high %v728, %v936
        %v1016 = vunpack.c.l.s4 1983009808
        %v1017 = vunpack.c.0.s8 %v1016
        %v1018 = vlaneseq
        %v1019 = vshrl.u32 %v1018, 7
        %v1020 = vsub.s32 %v1017, %v1019
        %v1021 = vrot.slane %v1013, %v1020
        %v1023 = vunpack.c.l.s4 1983009808
        %v1024 = vunpack.c.0.s8 %v1023
        %v1025 = vlaneseq
        %v1026 = vshrl.u32 %v1025, 7
        %v1027 = vsub.s32 %v1024, %v1026
        %v1028 = vrot.slane %v1014, %v1027
        %v1029 = vcombine.low %v930, %v942
        %v1030 = vcombine.high %v930, %v942
        %v1032 = vunpack.c.l.s4 1983009808
        %v1033 = vunpack.c.0.s8 %v1032
        %v1034 = vlaneseq
        %v1035 = vshrl.u32 %v1034, 7
        %v1036 = vsub.s32 %v1033, %v1035
        %v1037 = vrot.slane %v1029, %v1036
        %v1039 = vunpack.c.l.s4 1983009808
        %v1040 = vunpack.c.0.s8 %v1039
        %v1041 = vlaneseq
        %v1042 = vshrl.u32 %v1041, 7
        %v1043 = vsub.s32 %v1040, %v1042
        %v1044 = vrot.slane %v1030, %v1043
        %v1045 = vcombine.low %v1021, %v1037
        %v1046 = vcombine.high %v1021, %v1037
        %v1048 = vunpack.c.l.s4 1934713408
        %v1049 = vunpack.c.0.s8 %v1048
        %v1050 = vlaneseq
        %v1051 = vshrl.u32 %v1050, 7
        %v1052 = vsub.s32 %v1049, %v1051
        %v1053 = vrot.slane %v1045, %v1052
        %v1055 = vunpack.c.l.s4 1934713408
        %v1056 = vunpack.c.0.s8 %v1055
        %v1057 = vlaneseq
        %v1058 = vshrl.u32 %v1057, 7
        %v1059 = vsub.s32 %v1056, %v1058
        %v1060 = vrot.slane %v1046, %v1059
        %v1061 = vcombine.low %v1028, %v1044
        %v1062 = vcombine.high %v1028, %v1044
        %v1064 = vunpack.c.l.s4 1934713408
        %v1065 = vunpack.c.0.s8 %v1064
        %v1066 = vlaneseq
        %v1067 = vshrl.u32 %v1066, 7
        %v1068 = vsub.s32 %v1065, %v1067
        %v1069 = vrot.slane %v1061, %v1068
        %v1071 = vunpack.c.l.s4 1934713408
        %v1072 = vunpack.c.0.s8 %v1071
        %v1073 = vlaneseq
        %v1074 = vshrl.u32 %v1073, 7
        %v1075 = vsub.s32 %v1072, %v1074
        %v1076 = vrot.slane %v1062, %v1075
        %v1077 = vcombine.high %v1053, 0.0
        %v1078 = vcombine.high %v1060, 0.0
        %v1079 = vcombine.high %v1069, 0.0
        %v1080 = vcombine.high %v1076, 0.0
        %v1081 = vcombine.low %v985, %v992
        %v1083 = vunpack.c.l.s4 1983009808
        %v1084 = vunpack.c.0.s8 %v1083
        %v1085 = vlaneseq
        %v1086 = vshrl.u32 %v1085, 7
        %v1087 = vsub.s32 %v1084, %v1086
        %v1088 = vrot.slane %v1081, %v1087
        %v1089 = vcombine.low %v1009, %v1010
        %v1091 = vunpack.c.l.s4 1983009808
        %v1092 = vunpack.c.0.s8 %v1091
        %v1093 = vlaneseq
        %v1094 = vshrl.u32 %v1093, 7
        %v1095 = vsub.s32 %v1092, %v1094
        %v1096 = vrot.slane %v1089, %v1095
        %v1097 = vcombine.low %v1001, %v1008
        %v1099 = vunpack.c.l.s4 1983009808
        %v1100 = vunpack.c.0.s8 %v1099
        %v1101 = vlaneseq
        %v1102 = vshrl.u32 %v1101, 7
        %v1103 = vsub.s32 %v1100, %v1102
        %v1104 = vrot.slane %v1097, %v1103
        %v1105 = vcombine.low %v1011, %v1012
        %v1107 = vunpack.c.l.s4 1983009808
        %v1108 = vunpack.c.0.s8 %v1107
        %v1109 = vlaneseq
        %v1110 = vshrl.u32 %v1109, 7
        %v1111 = vsub.s32 %v1108, %v1110
        %v1112 = vrot.slane %v1105, %v1111
        %v1113 = vcombine.low %v1088, %v1096
        %v1114 = vcombine.high %v1088, %v1096
        %v1116 = vunpack.c.l.s4 1934713408
        %v1117 = vunpack.c.0.s8 %v1116
        %v1118 = vlaneseq
        %v1119 = vshrl.u32 %v1118, 7
        %v1120 = vsub.s32 %v1117, %v1119
        %v1121 = vrot.slane %v1113, %v1120
        %v1123 = vunpack.c.l.s4 1934713408
        %v1124 = vunpack.c.0.s8 %v1123
        %v1125 = vlaneseq
        %v1126 = vshrl.u32 %v1125, 7
        %v1127 = vsub.s32 %v1124, %v1126
        %v1128 = vrot.slane %v1114, %v1127
        %v1129 = vcombine.low %v1104, %v1112
        %v1130 = vcombine.high %v1104, %v1112
        %v1132 = vunpack.c.l.s4 1934713408
        %v1133 = vunpack.c.0.s8 %v1132
        %v1134 = vlaneseq
        %v1135 = vshrl.u32 %v1134, 7
        %v1136 = vsub.s32 %v1133, %v1135
        %v1137 = vrot.slane %v1129, %v1136
        %v1139 = vunpack.c.l.s4 1934713408
        %v1140 = vunpack.c.0.s8 %v1139
        %v1141 = vlaneseq
        %v1142 = vshrl.u32 %v1141, 7
        %v1143 = vsub.s32 %v1140, %v1142
        %v1144 = vrot.slane %v1130, %v1143
        %v1145 = vcombine.low %v1121, %v1137
        %v1146 = vcombine.high %v1121, %v1137
        %v1147 = vcombine.low %v1128, %v1144
        %v1148 = vcombine.high %v1128, %v1144
        %v1149 = vcombine.low %v1053, %v1060
        %v1151 = vunpack.c.l.s4 1983009808
        %v1152 = vunpack.c.0.s8 %v1151
        %v1153 = vlaneseq
        %v1154 = vshrl.u32 %v1153, 7
        %v1155 = vsub.s32 %v1152, %v1154
        %v1156 = vrot.slane %v1149, %v1155
        %v1157 = vcombine.low %v1077, %v1078
        %v1159 = vunpack.c.l.s4 1983009808
        %v1160 = vunpack.c.0.s8 %v1159
        %v1161 = vlaneseq
        %v1162 = vshrl.u32 %v1161, 7
        %v1163 = vsub.s32 %v1160, %v1162
        %v1164 = vrot.slane %v1157, %v1163
        %v1165 = vcombine.low %v1069, %v1076
        %v1167 = vunpack.c.l.s4 1983009808
        %v1168 = vunpack.c.0.s8 %v1167
        %v1169 = vlaneseq
        %v1170 = vshrl.u32 %v1169, 7
        %v1171 = vsub.s32 %v1168, %v1170
        %v1172 = vrot.slane %v1165, %v1171
        %v1173 = vcombine.low %v1079, %v1080
        %v1175 = vunpack.c.l.s4 1983009808
        %v1176 = vunpack.c.0.s8 %v1175
        %v1177 = vlaneseq
        %v1178 = vshrl.u32 %v1177, 7
        %v1179 = vsub.s32 %v1176, %v1178
        %v1180 = vrot.slane %v1173, %v1179
        %v1181 = vcombine.low %v1156, %v1164
        %v1182 = vcombine.high %v1156, %v1164
        %v1184 = vunpack.c.l.s4 1934713408
        %v1185 = vunpack.c.0.s8 %v1184
        %v1186 = vlaneseq
        %v1187 = vshrl.u32 %v1186, 7
        %v1188 = vsub.s32 %v1185, %v1187
        %v1189 = vrot.slane %v1181, %v1188
        %v1191 = vunpack.c.l.s4 1934713408
        %v1192 = vunpack.c.0.s8 %v1191
        %v1193 = vlaneseq
        %v1194 = vshrl.u32 %v1193, 7
        %v1195 = vsub.s32 %v1192, %v1194
        %v1196 = vrot.slane %v1182, %v1195
        %v1197 = vcombine.low %v1172, %v1180
        %v1198 = vcombine.high %v1172, %v1180
        %v1200 = vunpack.c.l.s4 1934713408
        %v1201 = vunpack.c.0.s8 %v1200
        %v1202 = vlaneseq
        %v1203 = vshrl.u32 %v1202, 7
        %v1204 = vsub.s32 %v1201, %v1203
        %v1205 = vrot.slane %v1197, %v1204
        %v1207 = vunpack.c.l.s4 1934713408
        %v1208 = vunpack.c.0.s8 %v1207
        %v1209 = vlaneseq
        %v1210 = vshrl.u32 %v1209, 7
        %v1211 = vsub.s32 %v1208, %v1210
        %v1212 = vrot.slane %v1198, %v1211
        %v1213 = vcombine.low %v1189, %v1205
        %v1214 = vcombine.high %v1189, %v1205
        %v1215 = vcombine.low %v1196, %v1212
        %v1216 = vcombine.high %v1196, %v1212
        %1219 = vrot.lane.b32.xlu0 %v819, 96
        %v1220 = vpop.permute.xlu0 %1219
        %1221 = vrot.lane.b32.xlu0 %v824, 96
        %v1222 = vpop.permute.xlu0 %1221
        %1225 = vrot.lane.b32.xlu0 %v819, 64
        %v1226 = vpop.permute.xlu0 %1225
        %1227 = vrot.lane.b32.xlu0 %v824, 64
        %v1228 = vpop.permute.xlu0 %1227
        %1231 = vrot.lane.b32.xlu0 %v819, 32
        %v1232 = vpop.permute.xlu0 %1231
        %1233 = vrot.lane.b32.xlu0 %v824, 32
        %v1234 = vpop.permute.xlu0 %1233
        %v1237 = vcombine.low %v819, %v1226
        %v1238 = vcombine.high %v819, %v1226
        %v1240 = vunpack.c.l.s4 1983009808
        %v1241 = vunpack.c.0.s8 %v1240
        %v1242 = vlaneseq
        %v1243 = vshrl.u32 %v1242, 7
        %v1244 = vsub.s32 %v1241, %v1243
        %v1245 = vrot.slane %v1237, %v1244
        %v1247 = vunpack.c.l.s4 1983009808
        %v1248 = vunpack.c.0.s8 %v1247
        %v1249 = vlaneseq
        %v1250 = vshrl.u32 %v1249, 7
        %v1251 = vsub.s32 %v1248, %v1250
        %v1252 = vrot.slane %v1238, %v1251
        %v1253 = vcombine.low %v1220, %v1232
        %v1254 = vcombine.high %v1220, %v1232
        %v1256 = vunpack.c.l.s4 1983009808
        %v1257 = vunpack.c.0.s8 %v1256
        %v1258 = vlaneseq
        %v1259 = vshrl.u32 %v1258, 7
        %v1260 = vsub.s32 %v1257, %v1259
        %v1261 = vrot.slane %v1253, %v1260
        %v1263 = vunpack.c.l.s4 1983009808
        %v1264 = vunpack.c.0.s8 %v1263
        %v1265 = vlaneseq
        %v1266 = vshrl.u32 %v1265, 7
        %v1267 = vsub.s32 %v1264, %v1266
        %v1268 = vrot.slane %v1254, %v1267
        %v1269 = vcombine.low %v1245, %v1261
        %v1270 = vcombine.high %v1245, %v1261
        %v1272 = vunpack.c.l.s4 1934713408
        %v1273 = vunpack.c.0.s8 %v1272
        %v1274 = vlaneseq
        %v1275 = vshrl.u32 %v1274, 7
        %v1276 = vsub.s32 %v1273, %v1275
        %v1277 = vrot.slane %v1269, %v1276
        %v1279 = vunpack.c.l.s4 1934713408
        %v1280 = vunpack.c.0.s8 %v1279
        %v1281 = vlaneseq
        %v1282 = vshrl.u32 %v1281, 7
        %v1283 = vsub.s32 %v1280, %v1282
        %v1284 = vrot.slane %v1270, %v1283
        %v1285 = vcombine.low %v1252, %v1268
        %v1286 = vcombine.high %v1252, %v1268
        %v1288 = vunpack.c.l.s4 1934713408
        %v1289 = vunpack.c.0.s8 %v1288
        %v1290 = vlaneseq
        %v1291 = vshrl.u32 %v1290, 7
        %v1292 = vsub.s32 %v1289, %v1291
        %v1293 = vrot.slane %v1285, %v1292
        %v1295 = vunpack.c.l.s4 1934713408
        %v1296 = vunpack.c.0.s8 %v1295
        %v1297 = vlaneseq
        %v1298 = vshrl.u32 %v1297, 7
        %v1299 = vsub.s32 %v1296, %v1298
        %v1300 = vrot.slane %v1286, %v1299
        %v1301 = vcombine.high %v1277, 0.0
        %v1302 = vcombine.high %v1284, 0.0
        %v1303 = vcombine.high %v1293, 0.0
        %v1304 = vcombine.high %v1300, 0.0
        %v1305 = vcombine.low %v824, %v1228
        %v1306 = vcombine.high %v824, %v1228
        %v1308 = vunpack.c.l.s4 1983009808
        %v1309 = vunpack.c.0.s8 %v1308
        %v1310 = vlaneseq
        %v1311 = vshrl.u32 %v1310, 7
        %v1312 = vsub.s32 %v1309, %v1311
        %v1313 = vrot.slane %v1305, %v1312
        %v1315 = vunpack.c.l.s4 1983009808
        %v1316 = vunpack.c.0.s8 %v1315
        %v1317 = vlaneseq
        %v1318 = vshrl.u32 %v1317, 7
        %v1319 = vsub.s32 %v1316, %v1318
        %v1320 = vrot.slane %v1306, %v1319
        %v1321 = vcombine.low %v1222, %v1234
        %v1322 = vcombine.high %v1222, %v1234
        %v1324 = vunpack.c.l.s4 1983009808
        %v1325 = vunpack.c.0.s8 %v1324
        %v1326 = vlaneseq
        %v1327 = vshrl.u32 %v1326, 7
        %v1328 = vsub.s32 %v1325, %v1327
        %v1329 = vrot.slane %v1321, %v1328
        %v1331 = vunpack.c.l.s4 1983009808
        %v1332 = vunpack.c.0.s8 %v1331
        %v1333 = vlaneseq
        %v1334 = vshrl.u32 %v1333, 7
        %v1335 = vsub.s32 %v1332, %v1334
        %v1336 = vrot.slane %v1322, %v1335
        %v1337 = vcombine.low %v1313, %v1329
        %v1338 = vcombine.high %v1313, %v1329
        %v1340 = vunpack.c.l.s4 1934713408
        %v1341 = vunpack.c.0.s8 %v1340
        %v1342 = vlaneseq
        %v1343 = vshrl.u32 %v1342, 7
        %v1344 = vsub.s32 %v1341, %v1343
        %v1345 = vrot.slane %v1337, %v1344
        %v1347 = vunpack.c.l.s4 1934713408
        %v1348 = vunpack.c.0.s8 %v1347
        %v1349 = vlaneseq
        %v1350 = vshrl.u32 %v1349, 7
        %v1351 = vsub.s32 %v1348, %v1350
        %v1352 = vrot.slane %v1338, %v1351
        %v1353 = vcombine.low %v1320, %v1336
        %v1354 = vcombine.high %v1320, %v1336
        %v1356 = vunpack.c.l.s4 1934713408
        %v1357 = vunpack.c.0.s8 %v1356
        %v1358 = vlaneseq
        %v1359 = vshrl.u32 %v1358, 7
        %v1360 = vsub.s32 %v1357, %v1359
        %v1361 = vrot.slane %v1353, %v1360
        %v1363 = vunpack.c.l.s4 1934713408
        %v1364 = vunpack.c.0.s8 %v1363
        %v1365 = vlaneseq
        %v1366 = vshrl.u32 %v1365, 7
        %v1367 = vsub.s32 %v1364, %v1366
        %v1368 = vrot.slane %v1354, %v1367
        %v1369 = vcombine.high %v1345, 0.0
        %v1370 = vcombine.high %v1352, 0.0
        %v1371 = vcombine.high %v1361, 0.0
        %v1372 = vcombine.high %v1368, 0.0
        %v1373 = vcombine.low %v1277, %v1284
        %v1375 = vunpack.c.l.s4 1983009808
        %v1376 = vunpack.c.0.s8 %v1375
        %v1377 = vlaneseq
        %v1378 = vshrl.u32 %v1377, 7
        %v1379 = vsub.s32 %v1376, %v1378
        %v1380 = vrot.slane %v1373, %v1379
        %v1381 = vcombine.low %v1301, %v1302
        %v1383 = vunpack.c.l.s4 1983009808
        %v1384 = vunpack.c.0.s8 %v1383
        %v1385 = vlaneseq
        %v1386 = vshrl.u32 %v1385, 7
        %v1387 = vsub.s32 %v1384, %v1386
        %v1388 = vrot.slane %v1381, %v1387
        %v1389 = vcombine.low %v1293, %v1300
        %v1391 = vunpack.c.l.s4 1983009808
        %v1392 = vunpack.c.0.s8 %v1391
        %v1393 = vlaneseq
        %v1394 = vshrl.u32 %v1393, 7
        %v1395 = vsub.s32 %v1392, %v1394
        %v1396 = vrot.slane %v1389, %v1395
        %v1397 = vcombine.low %v1303, %v1304
        %v1399 = vunpack.c.l.s4 1983009808
        %v1400 = vunpack.c.0.s8 %v1399
        %v1401 = vlaneseq
        %v1402 = vshrl.u32 %v1401, 7
        %v1403 = vsub.s32 %v1400, %v1402
        %v1404 = vrot.slane %v1397, %v1403
        %v1405 = vcombine.low %v1380, %v1388
        %v1406 = vcombine.high %v1380, %v1388
        %v1408 = vunpack.c.l.s4 1934713408
        %v1409 = vunpack.c.0.s8 %v1408
        %v1410 = vlaneseq
        %v1411 = vshrl.u32 %v1410, 7
        %v1412 = vsub.s32 %v1409, %v1411
        %v1413 = vrot.slane %v1405, %v1412
        %v1415 = vunpack.c.l.s4 1934713408
        %v1416 = vunpack.c.0.s8 %v1415
        %v1417 = vlaneseq
        %v1418 = vshrl.u32 %v1417, 7
        %v1419 = vsub.s32 %v1416, %v1418
        %v1420 = vrot.slane %v1406, %v1419
        %v1421 = vcombine.low %v1396, %v1404
        %v1422 = vcombine.high %v1396, %v1404
        %v1424 = vunpack.c.l.s4 1934713408
        %v1425 = vunpack.c.0.s8 %v1424
        %v1426 = vlaneseq
        %v1427 = vshrl.u32 %v1426, 7
        %v1428 = vsub.s32 %v1425, %v1427
        %v1429 = vrot.slane %v1421, %v1428
        %v1431 = vunpack.c.l.s4 1934713408
        %v1432 = vunpack.c.0.s8 %v1431
        %v1433 = vlaneseq
        %v1434 = vshrl.u32 %v1433, 7
        %v1435 = vsub.s32 %v1432, %v1434
        %v1436 = vrot.slane %v1422, %v1435
        %v1437 = vcombine.low %v1413, %v1429
        %v1438 = vcombine.high %v1413, %v1429
        %v1439 = vcombine.low %v1420, %v1436
        %v1440 = vcombine.high %v1420, %v1436
        %v1441 = vcombine.low %v1345, %v1352
        %v1443 = vunpack.c.l.s4 1983009808
        %v1444 = vunpack.c.0.s8 %v1443
        %v1445 = vlaneseq
        %v1446 = vshrl.u32 %v1445, 7
        %v1447 = vsub.s32 %v1444, %v1446
        %v1448 = vrot.slane %v1441, %v1447
        %v1449 = vcombine.low %v1369, %v1370
        %v1451 = vunpack.c.l.s4 1983009808
        %v1452 = vunpack.c.0.s8 %v1451
        %v1453 = vlaneseq
        %v1454 = vshrl.u32 %v1453, 7
        %v1455 = vsub.s32 %v1452, %v1454
        %v1456 = vrot.slane %v1449, %v1455
        %v1457 = vcombine.low %v1361, %v1368
        %v1459 = vunpack.c.l.s4 1983009808
        %v1460 = vunpack.c.0.s8 %v1459
        %v1461 = vlaneseq
        %v1462 = vshrl.u32 %v1461, 7
        %v1463 = vsub.s32 %v1460, %v1462
        %v1464 = vrot.slane %v1457, %v1463
        %v1465 = vcombine.low %v1371, %v1372
        %v1467 = vunpack.c.l.s4 1983009808
        %v1468 = vunpack.c.0.s8 %v1467
        %v1469 = vlaneseq
        %v1470 = vshrl.u32 %v1469, 7
        %v1471 = vsub.s32 %v1468, %v1470
        %v1472 = vrot.slane %v1465, %v1471
        %v1473 = vcombine.low %v1448, %v1456
        %v1474 = vcombine.high %v1448, %v1456
        %v1476 = vunpack.c.l.s4 1934713408
        %v1477 = vunpack.c.0.s8 %v1476
        %v1478 = vlaneseq
        %v1479 = vshrl.u32 %v1478, 7
        %v1480 = vsub.s32 %v1477, %v1479
        %v1481 = vrot.slane %v1473, %v1480
        %v1483 = vunpack.c.l.s4 1934713408
        %v1484 = vunpack.c.0.s8 %v1483
        %v1485 = vlaneseq
        %v1486 = vshrl.u32 %v1485, 7
        %v1487 = vsub.s32 %v1484, %v1486
        %v1488 = vrot.slane %v1474, %v1487
        %v1489 = vcombine.low %v1464, %v1472
        %v1490 = vcombine.high %v1464, %v1472
        %v1492 = vunpack.c.l.s4 1934713408
        %v1493 = vunpack.c.0.s8 %v1492
        %v1494 = vlaneseq
        %v1495 = vshrl.u32 %v1494, 7
        %v1496 = vsub.s32 %v1493, %v1495
        %v1497 = vrot.slane %v1489, %v1496
        %v1499 = vunpack.c.l.s4 1934713408
        %v1500 = vunpack.c.0.s8 %v1499
        %v1501 = vlaneseq
        %v1502 = vshrl.u32 %v1501, 7
        %v1503 = vsub.s32 %v1500, %v1502
        %v1504 = vrot.slane %v1490, %v1503
        %v1505 = vcombine.low %v1481, %v1497
        %v1506 = vcombine.high %v1481, %v1497
        %v1507 = vcombine.low %v1488, %v1504
        %v1508 = vcombine.high %v1488, %v1504
        %1511 = vrot.lane.b32.xlu0 %v917, 96
        %v1512 = vpop.permute.xlu0 %1511
        %1513 = vrot.lane.b32.xlu0 %v922, 96
        %v1514 = vpop.permute.xlu0 %1513
        %1517 = vrot.lane.b32.xlu0 %v917, 64
        %v1518 = vpop.permute.xlu0 %1517
        %1519 = vrot.lane.b32.xlu0 %v922, 64
        %v1520 = vpop.permute.xlu0 %1519
        %1523 = vrot.lane.b32.xlu0 %v917, 32
        %v1524 = vpop.permute.xlu0 %1523
        %1525 = vrot.lane.b32.xlu0 %v922, 32
        %v1526 = vpop.permute.xlu0 %1525
        %v1529 = vcombine.low %v917, %v1518
        %v1530 = vcombine.high %v917, %v1518
        %v1532 = vunpack.c.l.s4 1983009808
        %v1533 = vunpack.c.0.s8 %v1532
        %v1534 = vlaneseq
        %v1535 = vshrl.u32 %v1534, 7
        %v1536 = vsub.s32 %v1533, %v1535
        %v1537 = vrot.slane %v1529, %v1536
        %v1539 = vunpack.c.l.s4 1983009808
        %v1540 = vunpack.c.0.s8 %v1539
        %v1541 = vlaneseq
        %v1542 = vshrl.u32 %v1541, 7
        %v1543 = vsub.s32 %v1540, %v1542
        %v1544 = vrot.slane %v1530, %v1543
        %v1545 = vcombine.low %v1512, %v1524
        %v1546 = vcombine.high %v1512, %v1524
        %v1548 = vunpack.c.l.s4 1983009808
        %v1549 = vunpack.c.0.s8 %v1548
        %v1550 = vlaneseq
        %v1551 = vshrl.u32 %v1550, 7
        %v1552 = vsub.s32 %v1549, %v1551
        %v1553 = vrot.slane %v1545, %v1552
        %v1555 = vunpack.c.l.s4 1983009808
        %v1556 = vunpack.c.0.s8 %v1555
        %v1557 = vlaneseq
        %v1558 = vshrl.u32 %v1557, 7
        %v1559 = vsub.s32 %v1556, %v1558
        %v1560 = vrot.slane %v1546, %v1559
        %v1561 = vcombine.low %v1537, %v1553
        %v1562 = vcombine.high %v1537, %v1553
        %v1564 = vunpack.c.l.s4 1934713408
        %v1565 = vunpack.c.0.s8 %v1564
        %v1566 = vlaneseq
        %v1567 = vshrl.u32 %v1566, 7
        %v1568 = vsub.s32 %v1565, %v1567
        %v1569 = vrot.slane %v1561, %v1568
        %v1571 = vunpack.c.l.s4 1934713408
        %v1572 = vunpack.c.0.s8 %v1571
        %v1573 = vlaneseq
        %v1574 = vshrl.u32 %v1573, 7
        %v1575 = vsub.s32 %v1572, %v1574
        %v1576 = vrot.slane %v1562, %v1575
        %v1577 = vcombine.low %v1544, %v1560
        %v1578 = vcombine.high %v1544, %v1560
        %v1580 = vunpack.c.l.s4 1934713408
        %v1581 = vunpack.c.0.s8 %v1580
        %v1582 = vlaneseq
        %v1583 = vshrl.u32 %v1582, 7
        %v1584 = vsub.s32 %v1581, %v1583
        %v1585 = vrot.slane %v1577, %v1584
        %v1587 = vunpack.c.l.s4 1934713408
        %v1588 = vunpack.c.0.s8 %v1587
        %v1589 = vlaneseq
        %v1590 = vshrl.u32 %v1589, 7
        %v1591 = vsub.s32 %v1588, %v1590
        %v1592 = vrot.slane %v1578, %v1591
        %v1593 = vcombine.high %v1569, 0.0
        %v1594 = vcombine.high %v1576, 0.0
        %v1595 = vcombine.high %v1585, 0.0
        %v1596 = vcombine.high %v1592, 0.0
        %v1597 = vcombine.low %v922, %v1520
        %v1598 = vcombine.high %v922, %v1520
        %v1600 = vunpack.c.l.s4 1983009808
        %v1601 = vunpack.c.0.s8 %v1600
        %v1602 = vlaneseq
        %v1603 = vshrl.u32 %v1602, 7
        %v1604 = vsub.s32 %v1601, %v1603
        %v1605 = vrot.slane %v1597, %v1604
        %v1607 = vunpack.c.l.s4 1983009808
        %v1608 = vunpack.c.0.s8 %v1607
        %v1609 = vlaneseq
        %v1610 = vshrl.u32 %v1609, 7
        %v1611 = vsub.s32 %v1608, %v1610
        %v1612 = vrot.slane %v1598, %v1611
        %v1613 = vcombine.low %v1514, %v1526
        %v1614 = vcombine.high %v1514, %v1526
        %v1616 = vunpack.c.l.s4 1983009808
        %v1617 = vunpack.c.0.s8 %v1616
        %v1618 = vlaneseq
        %v1619 = vshrl.u32 %v1618, 7
        %v1620 = vsub.s32 %v1617, %v1619
        %v1621 = vrot.slane %v1613, %v1620
        %v1623 = vunpack.c.l.s4 1983009808
        %v1624 = vunpack.c.0.s8 %v1623
        %v1625 = vlaneseq
        %v1626 = vshrl.u32 %v1625, 7
        %v1627 = vsub.s32 %v1624, %v1626
        %v1628 = vrot.slane %v1614, %v1627
        %v1629 = vcombine.low %v1605, %v1621
        %v1630 = vcombine.high %v1605, %v1621
        %v1632 = vunpack.c.l.s4 1934713408
        %v1633 = vunpack.c.0.s8 %v1632
        %v1634 = vlaneseq
        %v1635 = vshrl.u32 %v1634, 7
        %v1636 = vsub.s32 %v1633, %v1635
        %v1637 = vrot.slane %v1629, %v1636
        %v1639 = vunpack.c.l.s4 1934713408
        %v1640 = vunpack.c.0.s8 %v1639
        %v1641 = vlaneseq
        %v1642 = vshrl.u32 %v1641, 7
        %v1643 = vsub.s32 %v1640, %v1642
        %v1644 = vrot.slane %v1630, %v1643
        %v1645 = vcombine.low %v1612, %v1628
        %v1646 = vcombine.high %v1612, %v1628
        %v1648 = vunpack.c.l.s4 1934713408
        %v1649 = vunpack.c.0.s8 %v1648
        %v1650 = vlaneseq
        %v1651 = vshrl.u32 %v1650, 7
        %v1652 = vsub.s32 %v1649, %v1651
        %v1653 = vrot.slane %v1645, %v1652
        %v1655 = vunpack.c.l.s4 1934713408
        %v1656 = vunpack.c.0.s8 %v1655
        %v1657 = vlaneseq
        %v1658 = vshrl.u32 %v1657, 7
        %v1659 = vsub.s32 %v1656, %v1658
        %v1660 = vrot.slane %v1646, %v1659
        %v1661 = vcombine.high %v1637, 0.0
        %v1662 = vcombine.high %v1644, 0.0
        %v1663 = vcombine.high %v1653, 0.0
        %v1664 = vcombine.high %v1660, 0.0
        %v1665 = vcombine.low %v1569, %v1576
        %v1667 = vunpack.c.l.s4 1983009808
        %v1668 = vunpack.c.0.s8 %v1667
        %v1669 = vlaneseq
        %v1670 = vshrl.u32 %v1669, 7
        %v1671 = vsub.s32 %v1668, %v1670
        %v1672 = vrot.slane %v1665, %v1671
        %v1673 = vcombine.low %v1593, %v1594
        %v1675 = vunpack.c.l.s4 1983009808
        %v1676 = vunpack.c.0.s8 %v1675
        %v1677 = vlaneseq
        %v1678 = vshrl.u32 %v1677, 7
        %v1679 = vsub.s32 %v1676, %v1678
        %v1680 = vrot.slane %v1673, %v1679
        %v1681 = vcombine.low %v1585, %v1592
        %v1683 = vunpack.c.l.s4 1983009808
        %v1684 = vunpack.c.0.s8 %v1683
        %v1685 = vlaneseq
        %v1686 = vshrl.u32 %v1685, 7
        %v1687 = vsub.s32 %v1684, %v1686
        %v1688 = vrot.slane %v1681, %v1687
        %v1689 = vcombine.low %v1595, %v1596
        %v1691 = vunpack.c.l.s4 1983009808
        %v1692 = vunpack.c.0.s8 %v1691
        %v1693 = vlaneseq
        %v1694 = vshrl.u32 %v1693, 7
        %v1695 = vsub.s32 %v1692, %v1694
        %v1696 = vrot.slane %v1689, %v1695
        %v1697 = vcombine.low %v1672, %v1680
        %v1698 = vcombine.high %v1672, %v1680
        %v1700 = vunpack.c.l.s4 1934713408
        %v1701 = vunpack.c.0.s8 %v1700
        %v1702 = vlaneseq
        %v1703 = vshrl.u32 %v1702, 7
        %v1704 = vsub.s32 %v1701, %v1703
        %v1705 = vrot.slane %v1697, %v1704
        %v1707 = vunpack.c.l.s4 1934713408
        %v1708 = vunpack.c.0.s8 %v1707
        %v1709 = vlaneseq
        %v1710 = vshrl.u32 %v1709, 7
        %v1711 = vsub.s32 %v1708, %v1710
        %v1712 = vrot.slane %v1698, %v1711
        %v1713 = vcombine.low %v1688, %v1696
        %v1714 = vcombine.high %v1688, %v1696
        %v1716 = vunpack.c.l.s4 1934713408
        %v1717 = vunpack.c.0.s8 %v1716
        %v1718 = vlaneseq
        %v1719 = vshrl.u32 %v1718, 7
        %v1720 = vsub.s32 %v1717, %v1719
        %v1721 = vrot.slane %v1713, %v1720
        %v1723 = vunpack.c.l.s4 1934713408
        %v1724 = vunpack.c.0.s8 %v1723
        %v1725 = vlaneseq
        %v1726 = vshrl.u32 %v1725, 7
        %v1727 = vsub.s32 %v1724, %v1726
        %v1728 = vrot.slane %v1714, %v1727
        %v1729 = vcombine.low %v1705, %v1721
        %v1730 = vcombine.high %v1705, %v1721
        %v1731 = vcombine.low %v1712, %v1728
        %v1732 = vcombine.high %v1712, %v1728
        %v1733 = vcombine.low %v1637, %v1644
        %v1735 = vunpack.c.l.s4 1983009808
        %v1736 = vunpack.c.0.s8 %v1735
        %v1737 = vlaneseq
        %v1738 = vshrl.u32 %v1737, 7
        %v1739 = vsub.s32 %v1736, %v1738
        %v1740 = vrot.slane %v1733, %v1739
        %v1741 = vcombine.low %v1661, %v1662
        %v1743 = vunpack.c.l.s4 1983009808
        %v1744 = vunpack.c.0.s8 %v1743
        %v1745 = vlaneseq
        %v1746 = vshrl.u32 %v1745, 7
        %v1747 = vsub.s32 %v1744, %v1746
        %v1748 = vrot.slane %v1741, %v1747
        %v1749 = vcombine.low %v1653, %v1660
        %v1751 = vunpack.c.l.s4 1983009808
        %v1752 = vunpack.c.0.s8 %v1751
        %v1753 = vlaneseq
        %v1754 = vshrl.u32 %v1753, 7
        %v1755 = vsub.s32 %v1752, %v1754
        %v1756 = vrot.slane %v1749, %v1755
        %v1757 = vcombine.low %v1663, %v1664
        %v1759 = vunpack.c.l.s4 1983009808
        %v1760 = vunpack.c.0.s8 %v1759
        %v1761 = vlaneseq
        %v1762 = vshrl.u32 %v1761, 7
        %v1763 = vsub.s32 %v1760, %v1762
        %v1764 = vrot.slane %v1757, %v1763
        %v1765 = vcombine.low %v1740, %v1748
        %v1766 = vcombine.high %v1740, %v1748
        %v1768 = vunpack.c.l.s4 1934713408
        %v1769 = vunpack.c.0.s8 %v1768
        %v1770 = vlaneseq
        %v1771 = vshrl.u32 %v1770, 7
        %v1772 = vsub.s32 %v1769, %v1771
        %v1773 = vrot.slane %v1765, %v1772
        %v1775 = vunpack.c.l.s4 1934713408
        %v1776 = vunpack.c.0.s8 %v1775
        %v1777 = vlaneseq
        %v1778 = vshrl.u32 %v1777, 7
        %v1779 = vsub.s32 %v1776, %v1778
        %v1780 = vrot.slane %v1766, %v1779
        %v1781 = vcombine.low %v1756, %v1764
        %v1782 = vcombine.high %v1756, %v1764
        %v1784 = vunpack.c.l.s4 1934713408
        %v1785 = vunpack.c.0.s8 %v1784
        %v1786 = vlaneseq
        %v1787 = vshrl.u32 %v1786, 7
        %v1788 = vsub.s32 %v1785, %v1787
        %v1789 = vrot.slane %v1781, %v1788
        %v1791 = vunpack.c.l.s4 1934713408
        %v1792 = vunpack.c.0.s8 %v1791
        %v1793 = vlaneseq
        %v1794 = vshrl.u32 %v1793, 7
        %v1795 = vsub.s32 %v1792, %v1794
        %v1796 = vrot.slane %v1782, %v1795
        %v1797 = vcombine.low %v1773, %v1789
        %v1798 = vcombine.high %v1773, %v1789
        %v1799 = vcombine.low %v1780, %v1796
        %v1800 = vcombine.high %v1780, %v1796
        %vm1801 = vcmask 261120
        %v1803 = vsel %vm1801, %v1145, 0
        %v1806 = vsel %vm1801, %v1213, 0
        %v1809 = vsel %vm1801, %v1437, 0
        %v1812 = vsel %vm1801, %v1505, 0
        %1814 = vmatprep.subr.mxu0 0.0
        %1815 = vmatpush1.xpose.msra.mxu0 %v1809
        %1816 = vmatprep.subr.mxu0 0.0
        %1817 = vmatpush1.xpose.msra.mxu0 %v1812
        %1818 = vmatprep.subr.mxu0 0.0
        %1819 = vmatpush1.xpose.msra.mxu0 0.0
        %1820 = vmatprep.subr.mxu0 0.0
        %1821 = vmatpush1.xpose.msra.mxu0 0.0
        %1822 = vmatprep.subr.mxu0 0.0
        %1823 = vmatpush1.xpose.msra.mxu0 0.0
        %1824 = vmatprep.subr.mxu0 0.0
        %1825 = vmatpush1.xpose.msra.mxu0 0.0
        %1826 = vmatprep.subr.mxu0 0.0
        %1827 = vmatpush1.xpose.msra.mxu0 0.0
        %1828 = vmatprep.subr.mxu0 0.0
        %1829 = vmatpush1.xpose.msra.mxu0 0.0
        %1830 = vmatprep.subr.mxu0 0.0
        %1831 = vmatpush1.xpose.msra.mxu0 0.0
        %1832 = vmatprep.subr.mxu0 0.0
        %1833 = vmatpush1.xpose.msra.mxu0 0.0
        %1834 = vmatprep.subr.mxu0 0.0
        %1835 = vmatpush1.xpose.msra.mxu0 0.0
        %1836 = vmatprep.subr.mxu0 0.0
        %1837 = vmatpush1.xpose.msra.mxu0 0.0
        %1838 = vmatprep.subr.mxu0 0.0
        %1839 = vmatpush1.xpose.msra.mxu0 0.0
        %1840 = vmatprep.subr.mxu0 0.0
        %1841 = vmatpush1.xpose.msra.mxu0 0.0
        %1842 = vmatprep.subr.mxu0 0.0
        %1843 = vmatpush1.xpose.msra.mxu0 0.0
        %1844 = vmatprep.subr.mxu0 0.0
        %1845 = vmatpush1.xpose.msra.mxu0 0.0
        %1846 = vmatprep.subr.mxu0 0.0
        %1847 = vmatpush1.xpose.msra.mxu0 0.0
        %1848 = vmatprep.subr.mxu0 0.0
        %1849 = vmatpush1.xpose.msra.mxu0 0.0
        %1850 = vmatprep.subr.mxu0 0.0
        %1851 = vmatpush1.xpose.msra.mxu0 0.0
        %1852 = vmatprep.subr.mxu0 0.0
        %1853 = vmatpush1.xpose.msra.mxu0 0.0
        %1854 = vmatprep.subr.mxu0 0.0
        %1855 = vmatpush1.xpose.msra.mxu0 0.0
        %1856 = vmatprep.subr.mxu0 0.0
        %1857 = vmatpush1.xpose.msra.mxu0 0.0
        %1858 = vmatprep.subr.mxu0 0.0
        %1859 = vmatpush1.xpose.msra.mxu0 0.0
        %1860 = vmatprep.subr.mxu0 0.0
        %1861 = vmatpush1.xpose.msra.mxu0 0.0
        %1862 = vmatprep.subr.mxu0 0.0
        %1863 = vmatpush1.xpose.msra.mxu0 0.0
        %1864 = vmatprep.subr.mxu0 0.0
        %1865 = vmatpush1.xpose.msra.mxu0 0.0
        %1866 = vmatprep.subr.mxu0 0.0
        %1867 = vmatpush1.xpose.msra.mxu0 0.0
        %1868 = vmatprep.subr.mxu0 0.0
        %1869 = vmatpush1.xpose.msra.mxu0 0.0
        %1870 = vmatprep.subr.mxu0 0.0
        %1871 = vmatpush1.xpose.msra.mxu0 0.0
        %1872 = vmatprep.subr.mxu0 0.0
        %1873 = vmatpush1.xpose.msra.mxu0 0.0
        %1874 = vmatprep.subr.mxu0 0.0
        %1875 = vmatpush1.xpose.msra.mxu0 0.0
        %1876 = vmatprep.subr.mxu0 0.0
        %1877 = vmatpush1.xpose.msra.mxu0 0.0
        %1878 = vmatprep.mubr.f32.mxu0 0.0
        %1879 = vmatmul.mubr.f32.gmra.mrb[0].mxu0 %v1803
        %v1880 = vpop.f32.mrb[0].mxu0
        %v1881 = vadd.f32 0.0, %v1880
        %v1882 = vpop.f32.mrb[0].mxu0
        %1883 = vmatprep.mubr.f32.mxu0 0.0
        %1884 = vmatmul.mubr.f32.gmra.mrb[0].mxu0 %v1806
        %v1885 = vpop.f32.mrb[0].mxu0
        %v1886 = vadd.f32 0.0, %v1885
        %v1887 = vpop.f32.mrb[0].mxu0
        %1888 = vdwg.mxu0
        %v1890 = vsel %vm1801, %v1146, 0
        %v1893 = vsel %vm1801, %v1214, 0
        %v1896 = vsel %vm1801, %v1438, 0
        %v1899 = vsel %vm1801, %v1506, 0
        %1901 = vmatprep.subr.mxu0 0.0
        %1902 = vmatpush1.xpose.msra.mxu0 %v1896
        %1903 = vmatprep.subr.mxu0 0.0
        %1904 = vmatpush1.xpose.msra.mxu0 %v1899
        %1905 = vmatprep.subr.mxu0 0.0
        %1906 = vmatpush1.xpose.msra.mxu0 0.0
        %1907 = vmatprep.subr.mxu0 0.0
        %1908 = vmatpush1.xpose.msra.mxu0 0.0
        %1909 = vmatprep.subr.mxu0 0.0
        %1910 = vmatpush1.xpose.msra.mxu0 0.0
        %1911 = vmatprep.subr.mxu0 0.0
        %1912 = vmatpush1.xpose.msra.mxu0 0.0
        %1913 = vmatprep.subr.mxu0 0.0
        %1914 = vmatpush1.xpose.msra.mxu0 0.0
        %1915 = vmatprep.subr.mxu0 0.0
        %1916 = vmatpush1.xpose.msra.mxu0 0.0
        %1917 = vmatprep.subr.mxu0 0.0
        %1918 = vmatpush1.xpose.msra.mxu0 0.0
        %1919 = vmatprep.subr.mxu0 0.0
        %1920 = vmatpush1.xpose.msra.mxu0 0.0
        %1921 = vmatprep.subr.mxu0 0.0
        %1922 = vmatpush1.xpose.msra.mxu0 0.0
        %1923 = vmatprep.subr.mxu0 0.0
        %1924 = vmatpush1.xpose.msra.mxu0 0.0
        %1925 = vmatprep.subr.mxu0 0.0
        %1926 = vmatpush1.xpose.msra.mxu0 0.0
        %1927 = vmatprep.subr.mxu0 0.0
        %1928 = vmatpush1.xpose.msra.mxu0 0.0
        %1929 = vmatprep.subr.mxu0 0.0
        %1930 = vmatpush1.xpose.msra.mxu0 0.0
        %1931 = vmatprep.subr.mxu0 0.0
        %1932 = vmatpush1.xpose.msra.mxu0 0.0
        %1933 = vmatprep.subr.mxu0 0.0
        %1934 = vmatpush1.xpose.msra.mxu0 0.0
        %1935 = vmatprep.subr.mxu0 0.0
        %1936 = vmatpush1.xpose.msra.mxu0 0.0
        %1937 = vmatprep.subr.mxu0 0.0
        %1938 = vmatpush1.xpose.msra.mxu0 0.0
        %1939 = vmatprep.subr.mxu0 0.0
        %1940 = vmatpush1.xpose.msra.mxu0 0.0
        %1941 = vmatprep.subr.mxu0 0.0
        %1942 = vmatpush1.xpose.msra.mxu0 0.0
        %1943 = vmatprep.subr.mxu0 0.0
        %1944 = vmatpush1.xpose.msra.mxu0 0.0
        %1945 = vmatprep.subr.mxu0 0.0
        %1946 = vmatpush1.xpose.msra.mxu0 0.0
        %1947 = vmatprep.subr.mxu0 0.0
        %1948 = vmatpush1.xpose.msra.mxu0 0.0
        %1949 = vmatprep.subr.mxu0 0.0
        %1950 = vmatpush1.xpose.msra.mxu0 0.0
        %1951 = vmatprep.subr.mxu0 0.0
        %1952 = vmatpush1.xpose.msra.mxu0 0.0
        %1953 = vmatprep.subr.mxu0 0.0
        %1954 = vmatpush1.xpose.msra.mxu0 0.0
        %1955 = vmatprep.subr.mxu0 0.0
        %1956 = vmatpush1.xpose.msra.mxu0 0.0
        %1957 = vmatprep.subr.mxu0 0.0
        %1958 = vmatpush1.xpose.msra.mxu0 0.0
        %1959 = vmatprep.subr.mxu0 0.0
        %1960 = vmatpush1.xpose.msra.mxu0 0.0
        %1961 = vmatprep.subr.mxu0 0.0
        %1962 = vmatpush1.xpose.msra.mxu0 0.0
        %1963 = vmatprep.subr.mxu0 0.0
        %1964 = vmatpush1.xpose.msra.mxu0 0.0
        %1965 = vmatprep.mubr.f32.mxu0 0.0
        %1966 = vmatmul.mubr.f32.gmra.mrb[0].mxu0 %v1890
        %v1967 = vpop.f32.mrb[0].mxu0
        %v1968 = vadd.f32 0.0, %v1967
        %v1969 = vpop.f32.mrb[0].mxu0
        %1970 = vmatprep.mubr.f32.mxu0 0.0
        %1971 = vmatmul.mubr.f32.gmra.mrb[0].mxu0 %v1893
        %v1972 = vpop.f32.mrb[0].mxu0
        %v1973 = vadd.f32 0.0, %v1972
        %v1974 = vpop.f32.mrb[0].mxu0
        %1975 = vdwg.mxu0
        %v1977 = vsel %vm1801, %v1147, 0
        %v1980 = vsel %vm1801, %v1215, 0
        %v1983 = vsel %vm1801, %v1439, 0
        %v1986 = vsel %vm1801, %v1507, 0
        %1988 = vmatprep.subr.mxu0 0.0
        %1989 = vmatpush1.xpose.msra.mxu0 %v1983
        %1990 = vmatprep.subr.mxu0 0.0
        %1991 = vmatpush1.xpose.msra.mxu0 %v1986
        %1992 = vmatprep.subr.mxu0 0.0
        %1993 = vmatpush1.xpose.msra.mxu0 0.0
        %1994 = vmatprep.subr.mxu0 0.0
        %1995 = vmatpush1.xpose.msra.mxu0 0.0
        %1996 = vmatprep.subr.mxu0 0.0
        %1997 = vmatpush1.xpose.msra.mxu0 0.0
        %1998 = vmatprep.subr.mxu0 0.0
        %1999 = vmatpush1.xpose.msra.mxu0 0.0
        %2000 = vmatprep.subr.mxu0 0.0
        %2001 = vmatpush1.xpose.msra.mxu0 0.0
        %2002 = vmatprep.subr.mxu0 0.0
        %2003 = vmatpush1.xpose.msra.mxu0 0.0
        %2004 = vmatprep.subr.mxu0 0.0
        %2005 = vmatpush1.xpose.msra.mxu0 0.0
        %2006 = vmatprep.subr.mxu0 0.0
        %2007 = vmatpush1.xpose.msra.mxu0 0.0
        %2008 = vmatprep.subr.mxu0 0.0
        %2009 = vmatpush1.xpose.msra.mxu0 0.0
        %2010 = vmatprep.subr.mxu0 0.0
        %2011 = vmatpush1.xpose.msra.mxu0 0.0
        %2012 = vmatprep.subr.mxu0 0.0
        %2013 = vmatpush1.xpose.msra.mxu0 0.0
        %2014 = vmatprep.subr.mxu0 0.0
        %2015 = vmatpush1.xpose.msra.mxu0 0.0
        %2016 = vmatprep.subr.mxu0 0.0
        %2017 = vmatpush1.xpose.msra.mxu0 0.0
        %2018 = vmatprep.subr.mxu0 0.0
        %2019 = vmatpush1.xpose.msra.mxu0 0.0
        %2020 = vmatprep.subr.mxu0 0.0
        %2021 = vmatpush1.xpose.msra.mxu0 0.0
        %2022 = vmatprep.subr.mxu0 0.0
        %2023 = vmatpush1.xpose.msra.mxu0 0.0
        %2024 = vmatprep.subr.mxu0 0.0
        %2025 = vmatpush1.xpose.msra.mxu0 0.0
        %2026 = vmatprep.subr.mxu0 0.0
        %2027 = vmatpush1.xpose.msra.mxu0 0.0
        %2028 = vmatprep.subr.mxu0 0.0
        %2029 = vmatpush1.xpose.msra.mxu0 0.0
        %2030 = vmatprep.subr.mxu0 0.0
        %2031 = vmatpush1.xpose.msra.mxu0 0.0
        %2032 = vmatprep.subr.mxu0 0.0
        %2033 = vmatpush1.xpose.msra.mxu0 0.0
        %2034 = vmatprep.subr.mxu0 0.0
        %2035 = vmatpush1.xpose.msra.mxu0 0.0
        %2036 = vmatprep.subr.mxu0 0.0
        %2037 = vmatpush1.xpose.msra.mxu0 0.0
        %2038 = vmatprep.subr.mxu0 0.0
        %2039 = vmatpush1.xpose.msra.mxu0 0.0
        %2040 = vmatprep.subr.mxu0 0.0
        %2041 = vmatpush1.xpose.msra.mxu0 0.0
        %2042 = vmatprep.subr.mxu0 0.0
        %2043 = vmatpush1.xpose.msra.mxu0 0.0
        %2044 = vmatprep.subr.mxu0 0.0
        %2045 = vmatpush1.xpose.msra.mxu0 0.0
        %2046 = vmatprep.subr.mxu0 0.0
        %2047 = vmatpush1.xpose.msra.mxu0 0.0
        %2048 = vmatprep.subr.mxu0 0.0
        %2049 = vmatpush1.xpose.msra.mxu0 0.0
        %2050 = vmatprep.subr.mxu0 0.0
        %2051 = vmatpush1.xpose.msra.mxu0 0.0
        %2052 = vmatprep.mubr.f32.mxu0 0.0
        %2053 = vmatmul.mubr.f32.gmra.mrb[0].mxu0 %v1977
        %v2054 = vpop.f32.mrb[0].mxu0
        %v2055 = vadd.f32 0.0, %v2054
        %v2056 = vpop.f32.mrb[0].mxu0
        %2057 = vmatprep.mubr.f32.mxu0 0.0
        %2058 = vmatmul.mubr.f32.gmra.mrb[0].mxu0 %v1980
        %v2059 = vpop.f32.mrb[0].mxu0
        %v2060 = vadd.f32 0.0, %v2059
        %v2061 = vpop.f32.mrb[0].mxu0
        %2062 = vdwg.mxu0
        %v2064 = vsel %vm1801, %v1148, 0
        %v2067 = vsel %vm1801, %v1216, 0
        %v2070 = vsel %vm1801, %v1440, 0
        %v2073 = vsel %vm1801, %v1508, 0
        %2075 = vmatprep.subr.mxu0 0.0
        %2076 = vmatpush1.xpose.msra.mxu0 %v2070
        %2077 = vmatprep.subr.mxu0 0.0
        %2078 = vmatpush1.xpose.msra.mxu0 %v2073
        %2079 = vmatprep.subr.mxu0 0.0
        %2080 = vmatpush1.xpose.msra.mxu0 0.0
        %2081 = vmatprep.subr.mxu0 0.0
        %2082 = vmatpush1.xpose.msra.mxu0 0.0
        %2083 = vmatprep.subr.mxu0 0.0
        %2084 = vmatpush1.xpose.msra.mxu0 0.0
        %2085 = vmatprep.subr.mxu0 0.0
        %2086 = vmatpush1.xpose.msra.mxu0 0.0
        %2087 = vmatprep.subr.mxu0 0.0
        %2088 = vmatpush1.xpose.msra.mxu0 0.0
        %2089 = vmatprep.subr.mxu0 0.0
        %2090 = vmatpush1.xpose.msra.mxu0 0.0
        %2091 = vmatprep.subr.mxu0 0.0
        %2092 = vmatpush1.xpose.msra.mxu0 0.0
        %2093 = vmatprep.subr.mxu0 0.0
        %2094 = vmatpush1.xpose.msra.mxu0 0.0
        %2095 = vmatprep.subr.mxu0 0.0
        %2096 = vmatpush1.xpose.msra.mxu0 0.0
        %2097 = vmatprep.subr.mxu0 0.0
        %2098 = vmatpush1.xpose.msra.mxu0 0.0
        %2099 = vmatprep.subr.mxu0 0.0
        %2100 = vmatpush1.xpose.msra.mxu0 0.0
        %2101 = vmatprep.subr.mxu0 0.0
        %2102 = vmatpush1.xpose.msra.mxu0 0.0
        %2103 = vmatprep.subr.mxu0 0.0
        %2104 = vmatpush1.xpose.msra.mxu0 0.0
        %2105 = vmatprep.subr.mxu0 0.0
        %2106 = vmatpush1.xpose.msra.mxu0 0.0
        %2107 = vmatprep.subr.mxu0 0.0
        %2108 = vmatpush1.xpose.msra.mxu0 0.0
        %2109 = vmatprep.subr.mxu0 0.0
        %2110 = vmatpush1.xpose.msra.mxu0 0.0
        %2111 = vmatprep.subr.mxu0 0.0
        %2112 = vmatpush1.xpose.msra.mxu0 0.0
        %2113 = vmatprep.subr.mxu0 0.0
        %2114 = vmatpush1.xpose.msra.mxu0 0.0
        %2115 = vmatprep.subr.mxu0 0.0
        %2116 = vmatpush1.xpose.msra.mxu0 0.0
        %2117 = vmatprep.subr.mxu0 0.0
        %2118 = vmatpush1.xpose.msra.mxu0 0.0
        %2119 = vmatprep.subr.mxu0 0.0
        %2120 = vmatpush1.xpose.msra.mxu0 0.0
        %2121 = vmatprep.subr.mxu0 0.0
        %2122 = vmatpush1.xpose.msra.mxu0 0.0
        %2123 = vmatprep.subr.mxu0 0.0
        %2124 = vmatpush1.xpose.msra.mxu0 0.0
        %2125 = vmatprep.subr.mxu0 0.0
        %2126 = vmatpush1.xpose.msra.mxu0 0.0
        %2127 = vmatprep.subr.mxu0 0.0
        %2128 = vmatpush1.xpose.msra.mxu0 0.0
        %2129 = vmatprep.subr.mxu0 0.0
        %2130 = vmatpush1.xpose.msra.mxu0 0.0
        %2131 = vmatprep.subr.mxu0 0.0
        %2132 = vmatpush1.xpose.msra.mxu0 0.0
        %2133 = vmatprep.subr.mxu0 0.0
        %2134 = vmatpush1.xpose.msra.mxu0 0.0
        %2135 = vmatprep.subr.mxu0 0.0
        %2136 = vmatpush1.xpose.msra.mxu0 0.0
        %2137 = vmatprep.subr.mxu0 0.0
        %2138 = vmatpush1.xpose.msra.mxu0 0.0
        %2139 = vmatprep.mubr.f32.mxu0 0.0
        %2140 = vmatmul.mubr.f32.gmra.mrb[0].mxu0 %v2064
        %v2141 = vpop.f32.mrb[0].mxu0
        %v2142 = vadd.f32 0.0, %v2141
        %v2143 = vpop.f32.mrb[0].mxu0
        %2144 = vmatprep.mubr.f32.mxu0 0.0
        %2145 = vmatmul.mubr.f32.gmra.mrb[0].mxu0 %v2067
        %v2146 = vpop.f32.mrb[0].mxu0
        %v2147 = vadd.f32 0.0, %v2146
        %v2148 = vpop.f32.mrb[0].mxu0
        %2149 = vdwg.mxu0
        %v2150 = vld [vmem:[%s620] sm:$0xff]
        %v2151 = vld [vmem:[%s620 + $0x8] sm:$0xff]
        %vm2152 = vcmp.ne.s32.totalorder %v2150, 0
        %vm2153 = vcmp.ne.s32.totalorder %v2151, 0
        %v2154 = vsel %vm2152, 1, 0
        %v2155 = vsel %vm2153, 1, 0
        %vm2156 = vcmp.eq.s32.totalorder %v2154, 1
        %vm2157 = vcmp.eq.s32.totalorder %v2155, 1
        %v2158 = vsel %vm2156, %v1881, -1e+09
        %v2159 = vsel %vm2157, %v1886, -1e+09
        %v2160 = vsel %vm2156, %v1968, -1e+09
        %v2161 = vsel %vm2157, %v1973, -1e+09
        %v2162 = vsel %vm2156, %v2055, -1e+09
        %v2163 = vsel %vm2157, %v2060, -1e+09
        %v2164 = vsel %vm2156, %v2142, -1e+09
        %v2165 = vsel %vm2157, %v2147, -1e+09
        %vm2166 = vcmask 130048
        %v2167 = vsel %vm2166, %v2158, -inf
        %2168 = vmax.xlane.f32.xlu0 %v2167
        %v2169 = vpop.xlane.xlu0 %2168
        %v2170 = vsel %vm2166, %v2159, -inf
        %2171 = vmax.xlane.f32.xlu0 %v2170
        %v2172 = vpop.xlane.xlu0 %2171
        %v2173 = vsel %vm2166, %v2160, -inf
        %2174 = vmax.xlane.f32.xlu0 %v2173
        %v2175 = vpop.xlane.xlu0 %2174
        %v2176 = vsel %vm2166, %v2161, -inf
        %2177 = vmax.xlane.f32.xlu0 %v2176
        %v2178 = vpop.xlane.xlu0 %2177
        %v2179 = vsel %vm2166, %v2162, -inf
        %2180 = vmax.xlane.f32.xlu0 %v2179
        %v2181 = vpop.xlane.xlu0 %2180
        %v2182 = vsel %vm2166, %v2163, -inf
        %2183 = vmax.xlane.f32.xlu0 %v2182
        %v2184 = vpop.xlane.xlu0 %2183
        %v2185 = vsel %vm2166, %v2164, -inf
        %2186 = vmax.xlane.f32.xlu0 %v2185
        %v2187 = vpop.xlane.xlu0 %2186
        %v2188 = vsel %vm2166, %v2165, -inf
        %2189 = vmax.xlane.f32.xlu0 %v2188
        %v2190 = vpop.xlane.xlu0 %2189
        %v2191 = vsub.f32 %v2158, %v2169
        %v2192 = vsub.f32 %v2159, %v2172
        %v2193 = vsub.f32 %v2160, %v2175
        %v2194 = vsub.f32 %v2161, %v2178
        %v2195 = vsub.f32 %v2162, %v2181
        %v2196 = vsub.f32 %v2163, %v2184
        %v2197 = vsub.f32 %v2164, %v2187
        %v2198 = vsub.f32 %v2165, %v2190
        %v2199 = vmul.f32 %v2191, 1.442695
        %v2200 = vpow.pop %v2199
        %v2201 = vmul.f32 %v2192, 1.442695
        %v2202 = vpow.pop %v2201
        %v2203 = vmul.f32 %v2193, 1.442695
        %v2204 = vpow.pop %v2203
        %v2205 = vmul.f32 %v2194, 1.442695
        %v2206 = vpow.pop %v2205
        %v2207 = vmul.f32 %v2195, 1.442695
        %v2208 = vpow.pop %v2207
        %v2209 = vmul.f32 %v2196, 1.442695
        %v2210 = vpow.pop %v2209
        %v2211 = vmul.f32 %v2197, 1.442695
        %v2212 = vpow.pop %v2211
        %v2213 = vmul.f32 %v2198, 1.442695
        %v2214 = vpow.pop %v2213
        %v2215 = vsel %vm2166, %v2200, 0.0
        %2216 = vadd.xlane.f32.xlu0 %v2215
        %v2217 = vpop.xlane.xlu0 %2216
        %v2218 = vsel %vm2166, %v2202, 0.0
        %2219 = vadd.xlane.f32.xlu0 %v2218
        %v2220 = vpop.xlane.xlu0 %2219
        %v2221 = vsel %vm2166, %v2204, 0.0
        %2222 = vadd.xlane.f32.xlu0 %v2221
        %v2223 = vpop.xlane.xlu0 %2222
        %v2224 = vsel %vm2166, %v2206, 0.0
        %2225 = vadd.xlane.f32.xlu0 %v2224
        %v2226 = vpop.xlane.xlu0 %2225
        %v2227 = vsel %vm2166, %v2208, 0.0
        %2228 = vadd.xlane.f32.xlu0 %v2227
        %v2229 = vpop.xlane.xlu0 %2228
        %v2230 = vsel %vm2166, %v2210, 0.0
        %2231 = vadd.xlane.f32.xlu0 %v2230
        %v2232 = vpop.xlane.xlu0 %2231
        %v2233 = vsel %vm2166, %v2212, 0.0
        %2234 = vadd.xlane.f32.xlu0 %v2233
        %v2235 = vpop.xlane.xlu0 %2234
        %v2236 = vsel %vm2166, %v2214, 0.0
        %2237 = vadd.xlane.f32.xlu0 %v2236
        %v2238 = vpop.xlane.xlu0 %2237
        %v2239 = vrcp.pop %v2217
        %v2240 = vrcp.pop %v2220
        %v2241 = vrcp.pop %v2223
        %v2242 = vrcp.pop %v2226
        %v2243 = vrcp.pop %v2229
        %v2244 = vrcp.pop %v2232
        %v2245 = vrcp.pop %v2235
        %v2246 = vrcp.pop %v2238
        %v2247 = vmul.f32 %v2200, %v2239
        %v2248 = vmul.f32 %v2202, %v2240
        %v2249 = vmul.f32 %v2204, %v2241
        %v2250 = vmul.f32 %v2206, %v2242
        %v2251 = vmul.f32 %v2208, %v2243
        %v2252 = vmul.f32 %v2210, %v2244
        %v2253 = vmul.f32 %v2212, %v2245
        %v2254 = vmul.f32 %v2214, %v2246
        %v2256 = vsel %vm2166, %v2247, 0
        %v2259 = vsel %vm2166, %v2248, 0
        %2261 = vmatprep.subr.mxu0 0.0
        %2262 = vmatpush1.msra.mxu0 %v1729
        %2263 = vmatprep.subr.mxu0 0.0
        %2264 = vmatpush1.msra.mxu0 %v1797
        %2265 = vmatprep.subr.mxu0 0.0
        %2266 = vmatpush1.msra.mxu0 0.0
        %2267 = vmatprep.subr.mxu0 0.0
        %2268 = vmatpush1.msra.mxu0 0.0
        %2269 = vmatprep.subr.mxu0 0.0
        %2270 = vmatpush1.msra.mxu0 0.0
        %2271 = vmatprep.subr.mxu0 0.0
        %2272 = vmatpush1.msra.mxu0 0.0
        %2273 = vmatprep.subr.mxu0 0.0
        %2274 = vmatpush1.msra.mxu0 0.0
        %2275 = vmatprep.subr.mxu0 0.0
        %2276 = vmatpush1.msra.mxu0 0.0
        %2277 = vmatprep.subr.mxu0 0.0
        %2278 = vmatpush1.msra.mxu0 0.0
        %2279 = vmatprep.subr.mxu0 0.0
        %2280 = vmatpush1.msra.mxu0 0.0
        %2281 = vmatprep.subr.mxu0 0.0
        %2282 = vmatpush1.msra.mxu0 0.0
        %2283 = vmatprep.subr.mxu0 0.0
        %2284 = vmatpush1.msra.mxu0 0.0
        %2285 = vmatprep.subr.mxu0 0.0
        %2286 = vmatpush1.msra.mxu0 0.0
        %2287 = vmatprep.subr.mxu0 0.0
        %2288 = vmatpush1.msra.mxu0 0.0
        %2289 = vmatprep.subr.mxu0 0.0
        %2290 = vmatpush1.msra.mxu0 0.0
        %2291 = vmatprep.subr.mxu0 0.0
        %2292 = vmatpush1.msra.mxu0 0.0
        %2293 = vmatprep.subr.mxu0 0.0
        %2294 = vmatpush1.msra.mxu0 0.0
        %2295 = vmatprep.subr.mxu0 0.0
        %2296 = vmatpush1.msra.mxu0 0.0
        %2297 = vmatprep.subr.mxu0 0.0
        %2298 = vmatpush1.msra.mxu0 0.0
        %2299 = vmatprep.subr.mxu0 0.0
        %2300 = vmatpush1.msra.mxu0 0.0
        %2301 = vmatprep.subr.mxu0 0.0
        %2302 = vmatpush1.msra.mxu0 0.0
        %2303 = vmatprep.subr.mxu0 0.0
        %2304 = vmatpush1.msra.mxu0 0.0
        %2305 = vmatprep.subr.mxu0 0.0
        %2306 = vmatpush1.msra.mxu0 0.0
        %2307 = vmatprep.subr.mxu0 0.0
        %2308 = vmatpush1.msra.mxu0 0.0
        %2309 = vmatprep.subr.mxu0 0.0
        %2310 = vmatpush1.msra.mxu0 0.0
        %2311 = vmatprep.subr.mxu0 0.0
        %2312 = vmatpush1.msra.mxu0 0.0
        %2313 = vmatprep.subr.mxu0 0.0
        %2314 = vmatpush1.msra.mxu0 0.0
        %2315 = vmatprep.subr.mxu0 0.0
        %2316 = vmatpush1.msra.mxu0 0.0
        %2317 = vmatprep.subr.mxu0 0.0
        %2318 = vmatpush1.msra.mxu0 0.0
        %2319 = vmatprep.subr.mxu0 0.0
        %2320 = vmatpush1.msra.mxu0 0.0
        %2321 = vmatprep.subr.mxu0 0.0
        %2322 = vmatpush1.msra.mxu0 0.0
        %2323 = vmatprep.subr.mxu0 0.0
        %2324 = vmatpush1.msra.mxu0 0.0
        %2325 = vmatprep.mubr.f32.mxu0 0.0
        %2326 = vmatmul.mubr.f32.gmra.mrb[0].mxu0 %v2256
        %v2327 = vpop.f32.mrb[0].mxu0
        %v2328 = vadd.f32 0.0, %v2327
        %v2329 = vpop.f32.mrb[0].mxu0
        %2330 = vmatprep.mubr.f32.mxu0 0.0
        %2331 = vmatmul.mubr.f32.gmra.mrb[0].mxu0 %v2259
        %v2332 = vpop.f32.mrb[0].mxu0
        %v2333 = vadd.f32 0.0, %v2332
        %v2334 = vpop.f32.mrb[0].mxu0
        %2335 = vdwg.mxu0
        %v2337 = vsel %vm2166, %v2249, 0
        %v2340 = vsel %vm2166, %v2250, 0
        %2342 = vmatprep.subr.mxu0 0.0
        %2343 = vmatpush1.msra.mxu0 %v1730
        %2344 = vmatprep.subr.mxu0 0.0
        %2345 = vmatpush1.msra.mxu0 %v1798
        %2346 = vmatprep.subr.mxu0 0.0
        %2347 = vmatpush1.msra.mxu0 0.0
        %2348 = vmatprep.subr.mxu0 0.0
        %2349 = vmatpush1.msra.mxu0 0.0
        %2350 = vmatprep.subr.mxu0 0.0
        %2351 = vmatpush1.msra.mxu0 0.0
        %2352 = vmatprep.subr.mxu0 0.0
        %2353 = vmatpush1.msra.mxu0 0.0
        %2354 = vmatprep.subr.mxu0 0.0
        %2355 = vmatpush1.msra.mxu0 0.0
        %2356 = vmatprep.subr.mxu0 0.0
        %2357 = vmatpush1.msra.mxu0 0.0
        %2358 = vmatprep.subr.mxu0 0.0
        %2359 = vmatpush1.msra.mxu0 0.0
        %2360 = vmatprep.subr.mxu0 0.0
        %2361 = vmatpush1.msra.mxu0 0.0
        %2362 = vmatprep.subr.mxu0 0.0
        %2363 = vmatpush1.msra.mxu0 0.0
        %2364 = vmatprep.subr.mxu0 0.0
        %2365 = vmatpush1.msra.mxu0 0.0
        %2366 = vmatprep.subr.mxu0 0.0
        %2367 = vmatpush1.msra.mxu0 0.0
        %2368 = vmatprep.subr.mxu0 0.0
        %2369 = vmatpush1.msra.mxu0 0.0
        %2370 = vmatprep.subr.mxu0 0.0
        %2371 = vmatpush1.msra.mxu0 0.0
        %2372 = vmatprep.subr.mxu0 0.0
        %2373 = vmatpush1.msra.mxu0 0.0
        %2374 = vmatprep.subr.mxu0 0.0
        %2375 = vmatpush1.msra.mxu0 0.0
        %2376 = vmatprep.subr.mxu0 0.0
        %2377 = vmatpush1.msra.mxu0 0.0
        %2378 = vmatprep.subr.mxu0 0.0
        %2379 = vmatpush1.msra.mxu0 0.0
        %2380 = vmatprep.subr.mxu0 0.0
        %2381 = vmatpush1.msra.mxu0 0.0
        %2382 = vmatprep.subr.mxu0 0.0
        %2383 = vmatpush1.msra.mxu0 0.0
        %2384 = vmatprep.subr.mxu0 0.0
        %2385 = vmatpush1.msra.mxu0 0.0
        %2386 = vmatprep.subr.mxu0 0.0
        %2387 = vmatpush1.msra.mxu0 0.0
        %2388 = vmatprep.subr.mxu0 0.0
        %2389 = vmatpush1.msra.mxu0 0.0
        %2390 = vmatprep.subr.mxu0 0.0
        %2391 = vmatpush1.msra.mxu0 0.0
        %2392 = vmatprep.subr.mxu0 0.0
        %2393 = vmatpush1.msra.mxu0 0.0
        %2394 = vmatprep.subr.mxu0 0.0
        %2395 = vmatpush1.msra.mxu0 0.0
        %2396 = vmatprep.subr.mxu0 0.0
        %2397 = vmatpush1.msra.mxu0 0.0
        %2398 = vmatprep.subr.mxu0 0.0
        %2399 = vmatpush1.msra.mxu0 0.0
        %2400 = vmatprep.subr.mxu0 0.0
        %2401 = vmatpush1.msra.mxu0 0.0
        %2402 = vmatprep.subr.mxu0 0.0
        %2403 = vmatpush1.msra.mxu0 0.0
        %2404 = vmatprep.subr.mxu0 0.0
        %2405 = vmatpush1.msra.mxu0 0.0
        %2406 = vmatprep.mubr.f32.mxu0 0.0
        %2407 = vmatmul.mubr.f32.gmra.mrb[0].mxu0 %v2337
        %v2408 = vpop.f32.mrb[0].mxu0
        %v2409 = vadd.f32 0.0, %v2408
        %v2410 = vpop.f32.mrb[0].mxu0
        %2411 = vmatprep.mubr.f32.mxu0 0.0
        %2412 = vmatmul.mubr.f32.gmra.mrb[0].mxu0 %v2340
        %v2413 = vpop.f32.mrb[0].mxu0
        %v2414 = vadd.f32 0.0, %v2413
        %v2415 = vpop.f32.mrb[0].mxu0
        %2416 = vdwg.mxu0
        %v2418 = vsel %vm2166, %v2251, 0
        %v2421 = vsel %vm2166, %v2252, 0
        %2423 = vmatprep.subr.mxu0 0.0
        %2424 = vmatpush1.msra.mxu0 %v1731
        %2425 = vmatprep.subr.mxu0 0.0
        %2426 = vmatpush1.msra.mxu0 %v1799
        %2427 = vmatprep.subr.mxu0 0.0
        %2428 = vmatpush1.msra.mxu0 0.0
        %2429 = vmatprep.subr.mxu0 0.0
        %2430 = vmatpush1.msra.mxu0 0.0
        %2431 = vmatprep.subr.mxu0 0.0
        %2432 = vmatpush1.msra.mxu0 0.0
        %2433 = vmatprep.subr.mxu0 0.0
        %2434 = vmatpush1.msra.mxu0 0.0
        %2435 = vmatprep.subr.mxu0 0.0
        %2436 = vmatpush1.msra.mxu0 0.0
        %2437 = vmatprep.subr.mxu0 0.0
        %2438 = vmatpush1.msra.mxu0 0.0
        %2439 = vmatprep.subr.mxu0 0.0
        %2440 = vmatpush1.msra.mxu0 0.0
        %2441 = vmatprep.subr.mxu0 0.0
        %2442 = vmatpush1.msra.mxu0 0.0
        %2443 = vmatprep.subr.mxu0 0.0
        %2444 = vmatpush1.msra.mxu0 0.0
        %2445 = vmatprep.subr.mxu0 0.0
        %2446 = vmatpush1.msra.mxu0 0.0
        %2447 = vmatprep.subr.mxu0 0.0
        %2448 = vmatpush1.msra.mxu0 0.0
        %2449 = vmatprep.subr.mxu0 0.0
        %2450 = vmatpush1.msra.mxu0 0.0
        %2451 = vmatprep.subr.mxu0 0.0
        %2452 = vmatpush1.msra.mxu0 0.0
        %2453 = vmatprep.subr.mxu0 0.0
        %2454 = vmatpush1.msra.mxu0 0.0
        %2455 = vmatprep.subr.mxu0 0.0
        %2456 = vmatpush1.msra.mxu0 0.0
        %2457 = vmatprep.subr.mxu0 0.0
        %2458 = vmatpush1.msra.mxu0 0.0
        %2459 = vmatprep.subr.mxu0 0.0
        %2460 = vmatpush1.msra.mxu0 0.0
        %2461 = vmatprep.subr.mxu0 0.0
        %2462 = vmatpush1.msra.mxu0 0.0
        %2463 = vmatprep.subr.mxu0 0.0
        %2464 = vmatpush1.msra.mxu0 0.0
        %2465 = vmatprep.subr.mxu0 0.0
        %2466 = vmatpush1.msra.mxu0 0.0
        %2467 = vmatprep.subr.mxu0 0.0
        %2468 = vmatpush1.msra.mxu0 0.0
        %2469 = vmatprep.subr.mxu0 0.0
        %2470 = vmatpush1.msra.mxu0 0.0
        %2471 = vmatprep.subr.mxu0 0.0
        %2472 = vmatpush1.msra.mxu0 0.0
        %2473 = vmatprep.subr.mxu0 0.0
        %2474 = vmatpush1.msra.mxu0 0.0
        %2475 = vmatprep.subr.mxu0 0.0
        %2476 = vmatpush1.msra.mxu0 0.0
        %2477 = vmatprep.subr.mxu0 0.0
        %2478 = vmatpush1.msra.mxu0 0.0
        %2479 = vmatprep.subr.mxu0 0.0
        %2480 = vmatpush1.msra.mxu0 0.0
        %2481 = vmatprep.subr.mxu0 0.0
        %2482 = vmatpush1.msra.mxu0 0.0
        %2483 = vmatprep.subr.mxu0 0.0
        %2484 = vmatpush1.msra.mxu0 0.0
        %2485 = vmatprep.subr.mxu0 0.0
        %2486 = vmatpush1.msra.mxu0 0.0
        %2487 = vmatprep.mubr.f32.mxu0 0.0
        %2488 = vmatmul.mubr.f32.gmra.mrb[0].mxu0 %v2418
        %v2489 = vpop.f32.mrb[0].mxu0
        %v2490 = vadd.f32 0.0, %v2489
        %v2491 = vpop.f32.mrb[0].mxu0
        %2492 = vmatprep.mubr.f32.mxu0 0.0
        %2493 = vmatmul.mubr.f32.gmra.mrb[0].mxu0 %v2421
        %v2494 = vpop.f32.mrb[0].mxu0
        %v2495 = vadd.f32 0.0, %v2494
        %v2496 = vpop.f32.mrb[0].mxu0
        %2497 = vdwg.mxu0
        %v2499 = vsel %vm2166, %v2253, 0
        %v2502 = vsel %vm2166, %v2254, 0
        %2504 = vmatprep.subr.mxu0 0.0
        %2505 = vmatpush1.msra.mxu0 %v1732
        %2506 = vmatprep.subr.mxu0 0.0
        %2507 = vmatpush1.msra.mxu0 %v1800
        %2508 = vmatprep.subr.mxu0 0.0
        %2509 = vmatpush1.msra.mxu0 0.0
        %2510 = vmatprep.subr.mxu0 0.0
        %2511 = vmatpush1.msra.mxu0 0.0
        %2512 = vmatprep.subr.mxu0 0.0
        %2513 = vmatpush1.msra.mxu0 0.0
        %2514 = vmatprep.subr.mxu0 0.0
        %2515 = vmatpush1.msra.mxu0 0.0
        %2516 = vmatprep.subr.mxu0 0.0
        %2517 = vmatpush1.msra.mxu0 0.0
        %2518 = vmatprep.subr.mxu0 0.0
        %2519 = vmatpush1.msra.mxu0 0.0
        %2520 = vmatprep.subr.mxu0 0.0
        %2521 = vmatpush1.msra.mxu0 0.0
        %2522 = vmatprep.subr.mxu0 0.0
        %2523 = vmatpush1.msra.mxu0 0.0
        %2524 = vmatprep.subr.mxu0 0.0
        %2525 = vmatpush1.msra.mxu0 0.0
        %2526 = vmatprep.subr.mxu0 0.0
        %2527 = vmatpush1.msra.mxu0 0.0
        %2528 = vmatprep.subr.mxu0 0.0
        %2529 = vmatpush1.msra.mxu0 0.0
        %2530 = vmatprep.subr.mxu0 0.0
        %2531 = vmatpush1.msra.mxu0 0.0
        %2532 = vmatprep.subr.mxu0 0.0
        %2533 = vmatpush1.msra.mxu0 0.0
        %2534 = vmatprep.subr.mxu0 0.0
        %2535 = vmatpush1.msra.mxu0 0.0
        %2536 = vmatprep.subr.mxu0 0.0
        %2537 = vmatpush1.msra.mxu0 0.0
        %2538 = vmatprep.subr.mxu0 0.0
        %2539 = vmatpush1.msra.mxu0 0.0
        %2540 = vmatprep.subr.mxu0 0.0
        %2541 = vmatpush1.msra.mxu0 0.0
        %2542 = vmatprep.subr.mxu0 0.0
        %2543 = vmatpush1.msra.mxu0 0.0
        %2544 = vmatprep.subr.mxu0 0.0
        %2545 = vmatpush1.msra.mxu0 0.0
        %2546 = vmatprep.subr.mxu0 0.0
        %2547 = vmatpush1.msra.mxu0 0.0
        %2548 = vmatprep.subr.mxu0 0.0
        %2549 = vmatpush1.msra.mxu0 0.0
        %2550 = vmatprep.subr.mxu0 0.0
        %2551 = vmatpush1.msra.mxu0 0.0
        %2552 = vmatprep.subr.mxu0 0.0
        %2553 = vmatpush1.msra.mxu0 0.0
        %2554 = vmatprep.subr.mxu0 0.0
        %2555 = vmatpush1.msra.mxu0 0.0
        %2556 = vmatprep.subr.mxu0 0.0
        %2557 = vmatpush1.msra.mxu0 0.0
        %2558 = vmatprep.subr.mxu0 0.0
        %2559 = vmatpush1.msra.mxu0 0.0
        %2560 = vmatprep.subr.mxu0 0.0
        %2561 = vmatpush1.msra.mxu0 0.0
        %2562 = vmatprep.subr.mxu0 0.0
        %2563 = vmatpush1.msra.mxu0 0.0
        %2564 = vmatprep.subr.mxu0 0.0
        %2565 = vmatpush1.msra.mxu0 0.0
        %2566 = vmatprep.subr.mxu0 0.0
        %2567 = vmatpush1.msra.mxu0 0.0
        %2568 = vmatprep.mubr.f32.mxu0 0.0
        %2569 = vmatmul.mubr.f32.gmra.mrb[0].mxu0 %v2499
        %v2570 = vpop.f32.mrb[0].mxu0
        %v2571 = vadd.f32 0.0, %v2570
        %v2572 = vpop.f32.mrb[0].mxu0
        %2573 = vmatprep.mubr.f32.mxu0 0.0
        %2574 = vmatmul.mubr.f32.gmra.mrb[0].mxu0 %v2502
        %v2575 = vpop.f32.mrb[0].mxu0
        %v2576 = vadd.f32 0.0, %v2575
        %v2577 = vpop.f32.mrb[0].mxu0
        %2578 = vdwg.mxu0
        %v2579 = vcombine.low %v2328, %v2490
        %v2580 = vcombine.high %v2328, %v2490
        %v2582 = vunpack.c.l.s4 1983009808
        %v2583 = vunpack.c.0.s8 %v2582
        %v2584 = vlaneseq
        %v2585 = vshrl.u32 %v2584, 7
        %v2586 = vsub.s32 %v2583, %v2585
        %v2587 = vrot.slane %v2579, %v2586
        %v2589 = vunpack.c.l.s4 1983009808
        %v2590 = vunpack.c.0.s8 %v2589
        %v2591 = vlaneseq
        %v2592 = vshrl.u32 %v2591, 7
        %v2593 = vsub.s32 %v2590, %v2592
        %v2594 = vrot.slane %v2580, %v2593
        %v2595 = vcombine.low %v2409, %v2571
        %v2596 = vcombine.high %v2409, %v2571
        %v2598 = vunpack.c.l.s4 1983009808
        %v2599 = vunpack.c.0.s8 %v2598
        %v2600 = vlaneseq
        %v2601 = vshrl.u32 %v2600, 7
        %v2602 = vsub.s32 %v2599, %v2601
        %v2603 = vrot.slane %v2595, %v2602
        %v2605 = vunpack.c.l.s4 1983009808
        %v2606 = vunpack.c.0.s8 %v2605
        %v2607 = vlaneseq
        %v2608 = vshrl.u32 %v2607, 7
        %v2609 = vsub.s32 %v2606, %v2608
        %v2610 = vrot.slane %v2596, %v2609
        %v2611 = vcombine.low %v2587, %v2603
        %v2612 = vcombine.high %v2587, %v2603
        %v2614 = vunpack.c.l.s4 1934713408
        %v2615 = vunpack.c.0.s8 %v2614
        %v2616 = vlaneseq
        %v2617 = vshrl.u32 %v2616, 7
        %v2618 = vsub.s32 %v2615, %v2617
        %v2619 = vrot.slane %v2611, %v2618
        %v2621 = vunpack.c.l.s4 1934713408
        %v2622 = vunpack.c.0.s8 %v2621
        %v2623 = vlaneseq
        %v2624 = vshrl.u32 %v2623, 7
        %v2625 = vsub.s32 %v2622, %v2624
        %v2626 = vrot.slane %v2612, %v2625
        %v2627 = vcombine.low %v2594, %v2610
        %v2628 = vcombine.high %v2594, %v2610
        %v2630 = vunpack.c.l.s4 1934713408
        %v2631 = vunpack.c.0.s8 %v2630
        %v2632 = vlaneseq
        %v2633 = vshrl.u32 %v2632, 7
        %v2634 = vsub.s32 %v2631, %v2633
        %v2635 = vrot.slane %v2627, %v2634
        %v2637 = vunpack.c.l.s4 1934713408
        %v2638 = vunpack.c.0.s8 %v2637
        %v2639 = vlaneseq
        %v2640 = vshrl.u32 %v2639, 7
        %v2641 = vsub.s32 %v2638, %v2640
        %v2642 = vrot.slane %v2628, %v2641
        %v2643 = vcombine.high %v2619, 0.0
        %v2644 = vcombine.high %v2626, 0.0
        %v2645 = vcombine.high %v2635, 0.0
        %v2646 = vcombine.high %v2642, 0.0
        %v2647 = vcombine.low %v2333, %v2495
        %v2648 = vcombine.high %v2333, %v2495
        %v2650 = vunpack.c.l.s4 1983009808
        %v2651 = vunpack.c.0.s8 %v2650
        %v2652 = vlaneseq
        %v2653 = vshrl.u32 %v2652, 7
        %v2654 = vsub.s32 %v2651, %v2653
        %v2655 = vrot.slane %v2647, %v2654
        %v2657 = vunpack.c.l.s4 1983009808
        %v2658 = vunpack.c.0.s8 %v2657
        %v2659 = vlaneseq
        %v2660 = vshrl.u32 %v2659, 7
        %v2661 = vsub.s32 %v2658, %v2660
        %v2662 = vrot.slane %v2648, %v2661
        %v2663 = vcombine.low %v2414, %v2576
        %v2664 = vcombine.high %v2414, %v2576
        %v2666 = vunpack.c.l.s4 1983009808
        %v2667 = vunpack.c.0.s8 %v2666
        %v2668 = vlaneseq
        %v2669 = vshrl.u32 %v2668, 7
        %v2670 = vsub.s32 %v2667, %v2669
        %v2671 = vrot.slane %v2663, %v2670
        %v2673 = vunpack.c.l.s4 1983009808
        %v2674 = vunpack.c.0.s8 %v2673
        %v2675 = vlaneseq
        %v2676 = vshrl.u32 %v2675, 7
        %v2677 = vsub.s32 %v2674, %v2676
        %v2678 = vrot.slane %v2664, %v2677
        %v2679 = vcombine.low %v2655, %v2671
        %v2680 = vcombine.high %v2655, %v2671
        %v2682 = vunpack.c.l.s4 1934713408
        %v2683 = vunpack.c.0.s8 %v2682
        %v2684 = vlaneseq
        %v2685 = vshrl.u32 %v2684, 7
        %v2686 = vsub.s32 %v2683, %v2685
        %v2687 = vrot.slane %v2679, %v2686
        %v2689 = vunpack.c.l.s4 1934713408
        %v2690 = vunpack.c.0.s8 %v2689
        %v2691 = vlaneseq
        %v2692 = vshrl.u32 %v2691, 7
        %v2693 = vsub.s32 %v2690, %v2692
        %v2694 = vrot.slane %v2680, %v2693
        %v2695 = vcombine.low %v2662, %v2678
        %v2696 = vcombine.high %v2662, %v2678
        %v2698 = vunpack.c.l.s4 1934713408
        %v2699 = vunpack.c.0.s8 %v2698
        %v2700 = vlaneseq
        %v2701 = vshrl.u32 %v2700, 7
        %v2702 = vsub.s32 %v2699, %v2701
        %v2703 = vrot.slane %v2695, %v2702
        %v2705 = vunpack.c.l.s4 1934713408
        %v2706 = vunpack.c.0.s8 %v2705
        %v2707 = vlaneseq
        %v2708 = vshrl.u32 %v2707, 7
        %v2709 = vsub.s32 %v2706, %v2708
        %v2710 = vrot.slane %v2696, %v2709
        %v2711 = vcombine.high %v2687, 0.0
        %v2712 = vcombine.high %v2694, 0.0
        %v2713 = vcombine.high %v2703, 0.0
        %v2714 = vcombine.high %v2710, 0.0
        %v2715 = vcombine.low %v2619, %v2626
        %v2717 = vunpack.c.l.s4 1983009808
        %v2718 = vunpack.c.0.s8 %v2717
        %v2719 = vlaneseq
        %v2720 = vshrl.u32 %v2719, 7
        %v2721 = vsub.s32 %v2718, %v2720
        %v2722 = vrot.slane %v2715, %v2721
        %v2723 = vcombine.low %v2643, %v2644
        %v2725 = vunpack.c.l.s4 1983009808
        %v2726 = vunpack.c.0.s8 %v2725
        %v2727 = vlaneseq
        %v2728 = vshrl.u32 %v2727, 7
        %v2729 = vsub.s32 %v2726, %v2728
        %v2730 = vrot.slane %v2723, %v2729
        %v2731 = vcombine.low %v2635, %v2642
        %v2733 = vunpack.c.l.s4 1983009808
        %v2734 = vunpack.c.0.s8 %v2733
        %v2735 = vlaneseq
        %v2736 = vshrl.u32 %v2735, 7
        %v2737 = vsub.s32 %v2734, %v2736
        %v2738 = vrot.slane %v2731, %v2737
        %v2739 = vcombine.low %v2645, %v2646
        %v2741 = vunpack.c.l.s4 1983009808
        %v2742 = vunpack.c.0.s8 %v2741
        %v2743 = vlaneseq
        %v2744 = vshrl.u32 %v2743, 7
        %v2745 = vsub.s32 %v2742, %v2744
        %v2746 = vrot.slane %v2739, %v2745
        %v2747 = vcombine.low %v2722, %v2730
        %v2748 = vcombine.high %v2722, %v2730
        %v2750 = vunpack.c.l.s4 1934713408
        %v2751 = vunpack.c.0.s8 %v2750
        %v2752 = vlaneseq
        %v2753 = vshrl.u32 %v2752, 7
        %v2754 = vsub.s32 %v2751, %v2753
        %v2755 = vrot.slane %v2747, %v2754
        %v2757 = vunpack.c.l.s4 1934713408
        %v2758 = vunpack.c.0.s8 %v2757
        %v2759 = vlaneseq
        %v2760 = vshrl.u32 %v2759, 7
        %v2761 = vsub.s32 %v2758, %v2760
        %v2762 = vrot.slane %v2748, %v2761
        %v2763 = vcombine.low %v2738, %v2746
        %v2764 = vcombine.high %v2738, %v2746
        %v2766 = vunpack.c.l.s4 1934713408
        %v2767 = vunpack.c.0.s8 %v2766
        %v2768 = vlaneseq
        %v2769 = vshrl.u32 %v2768, 7
        %v2770 = vsub.s32 %v2767, %v2769
        %v2771 = vrot.slane %v2763, %v2770
        %v2773 = vunpack.c.l.s4 1934713408
        %v2774 = vunpack.c.0.s8 %v2773
        %v2775 = vlaneseq
        %v2776 = vshrl.u32 %v2775, 7
        %v2777 = vsub.s32 %v2774, %v2776
        %v2778 = vrot.slane %v2764, %v2777
        %v2779 = vcombine.low %v2755, %v2771
        %v2780 = vcombine.high %v2755, %v2771
        %v2781 = vcombine.low %v2762, %v2778
        %v2782 = vcombine.high %v2762, %v2778
        %v2783 = vcombine.low %v2687, %v2694
        %v2785 = vunpack.c.l.s4 1983009808
        %v2786 = vunpack.c.0.s8 %v2785
        %v2787 = vlaneseq
        %v2788 = vshrl.u32 %v2787, 7
        %v2789 = vsub.s32 %v2786, %v2788
        %v2790 = vrot.slane %v2783, %v2789
        %v2791 = vcombine.low %v2711, %v2712
        %v2793 = vunpack.c.l.s4 1983009808
        %v2794 = vunpack.c.0.s8 %v2793
        %v2795 = vlaneseq
        %v2796 = vshrl.u32 %v2795, 7
        %v2797 = vsub.s32 %v2794, %v2796
        %v2798 = vrot.slane %v2791, %v2797
        %v2799 = vcombine.low %v2703, %v2710
        %v2801 = vunpack.c.l.s4 1983009808
        %v2802 = vunpack.c.0.s8 %v2801
        %v2803 = vlaneseq
        %v2804 = vshrl.u32 %v2803, 7
        %v2805 = vsub.s32 %v2802, %v2804
        %v2806 = vrot.slane %v2799, %v2805
        %v2807 = vcombine.low %v2713, %v2714
        %v2809 = vunpack.c.l.s4 1983009808
        %v2810 = vunpack.c.0.s8 %v2809
        %v2811 = vlaneseq
        %v2812 = vshrl.u32 %v2811, 7
        %v2813 = vsub.s32 %v2810, %v2812
        %v2814 = vrot.slane %v2807, %v2813
        %v2815 = vcombine.low %v2790, %v2798
        %v2816 = vcombine.high %v2790, %v2798
        %v2818 = vunpack.c.l.s4 1934713408
        %v2819 = vunpack.c.0.s8 %v2818
        %v2820 = vlaneseq
        %v2821 = vshrl.u32 %v2820, 7
        %v2822 = vsub.s32 %v2819, %v2821
        %v2823 = vrot.slane %v2815, %v2822
        %v2825 = vunpack.c.l.s4 1934713408
        %v2826 = vunpack.c.0.s8 %v2825
        %v2827 = vlaneseq
        %v2828 = vshrl.u32 %v2827, 7
        %v2829 = vsub.s32 %v2826, %v2828
        %v2830 = vrot.slane %v2816, %v2829
        %v2831 = vcombine.low %v2806, %v2814
        %v2832 = vcombine.high %v2806, %v2814
        %v2834 = vunpack.c.l.s4 1934713408
        %v2835 = vunpack.c.0.s8 %v2834
        %v2836 = vlaneseq
        %v2837 = vshrl.u32 %v2836, 7
        %v2838 = vsub.s32 %v2835, %v2837
        %v2839 = vrot.slane %v2831, %v2838
        %v2841 = vunpack.c.l.s4 1934713408
        %v2842 = vunpack.c.0.s8 %v2841
        %v2843 = vlaneseq
        %v2844 = vshrl.u32 %v2843, 7
        %v2845 = vsub.s32 %v2842, %v2844
        %v2846 = vrot.slane %v2832, %v2845
        %v2847 = vcombine.low %v2823, %v2839
        %v2848 = vcombine.high %v2823, %v2839
        %v2849 = vcombine.low %v2830, %v2846
        %v2850 = vcombine.high %v2830, %v2846
        %2853 = vrot.lane.b32.xlu0 %v2780, 32
        %v2854 = vpop.permute.xlu0 %2853
        %2855 = vrot.lane.b32.xlu0 %v2848, 32
        %v2856 = vpop.permute.xlu0 %2855
        %2861 = vrot.lane.b32.xlu0 %v2781, 64
        %v2862 = vpop.permute.xlu0 %2861
        %2863 = vrot.lane.b32.xlu0 %v2849, 64
        %v2864 = vpop.permute.xlu0 %2863
        %2869 = vrot.lane.b32.xlu0 %v2782, 96
        %v2870 = vpop.permute.xlu0 %2869
        %2871 = vrot.lane.b32.xlu0 %v2850, 96
        %v2872 = vpop.permute.xlu0 %2871
        %v2875 = vsel %vm1801, %v2779, %v2854
        %v2876 = vsel %vm1801, %v2847, %v2856
        %vm2877 = vcmask 523264
        %v2878 = vsel %vm2877, %v2875, %v2862
        %v2879 = vsel %vm2877, %v2876, %v2864
        %vm2880 = vcmask 785408
        %v2881 = vsel %vm2880, %v2878, %v2870
        %v2882 = vsel %vm2880, %v2879, %v2872
        %v2883 = vld [vmem:[#allocation13] sm:$0xff]
        %v2884 = vld [vmem:[#allocation13 + $0x8] sm:$0xff]
        %v2885 = vld [vmem:[#allocation13 + $0x10] sm:$0xff]
        %v2886 = vld [vmem:[#allocation13 + $0x18] sm:$0xff]
        %v2887 = vld [vmem:[#allocation13 + $0x20] sm:$0xff]
        %v2888 = vld [vmem:[#allocation13 + $0x28] sm:$0xff]
        %v2889 = vld [vmem:[#allocation13 + $0x30] sm:$0xff]
        %v2890 = vld [vmem:[#allocation13 + $0x38] sm:$0xff]
        %v2891 = vld [vmem:[#allocation13 + $0x40] sm:$0xff]
        %v2892 = vld [vmem:[#allocation13 + $0x48] sm:$0xff]
        %v2893 = vld [vmem:[#allocation13 + $0x50] sm:$0xff]
        %v2894 = vld [vmem:[#allocation13 + $0x58] sm:$0xff]
        %v2895 = vld [vmem:[#allocation13 + $0x60] sm:$0xff]
        %v2896 = vld [vmem:[#allocation13 + $0x68] sm:$0xff]
        %v2897 = vld [vmem:[#allocation13 + $0x70] sm:$0xff]
        %v2898 = vld [vmem:[#allocation13 + $0x78] sm:$0xff]
        %v2899 = vld [vmem:[%s10] sm:$0x1]
        %v2901 = vlaneseq
        %v2902 = vshrl.u32 %v2901, 7
        %v2903 = vsub.s32 0, %v2902
        %v2904 = vrot.slane %v2899, %v2903
        %2906 = vmatprep.subr.mxu0 0.0
        %2907 = vmatpush1.msra.mxu0 %v2883
        %2908 = vmatprep.subr.mxu0 0.0
        %2909 = vmatpush1.msra.mxu0 %v2884
        %2910 = vmatprep.subr.mxu0 0.0
        %2911 = vmatpush1.msra.mxu0 %v2885
        %2912 = vmatprep.subr.mxu0 0.0
        %2913 = vmatpush1.msra.mxu0 %v2886
        %2914 = vmatprep.subr.mxu0 0.0
        %2915 = vmatpush1.msra.mxu0 %v2887
        %2916 = vmatprep.subr.mxu0 0.0
        %2917 = vmatpush1.msra.mxu0 %v2888
        %2918 = vmatprep.subr.mxu0 0.0
        %2919 = vmatpush1.msra.mxu0 %v2889
        %2920 = vmatprep.subr.mxu0 0.0
        %2921 = vmatpush1.msra.mxu0 %v2890
        %2922 = vmatprep.subr.mxu0 0.0
        %2923 = vmatpush1.msra.mxu0 %v2891
        %2924 = vmatprep.subr.mxu0 0.0
        %2925 = vmatpush1.msra.mxu0 %v2892
        %2926 = vmatprep.subr.mxu0 0.0
        %2927 = vmatpush1.msra.mxu0 %v2893
        %2928 = vmatprep.subr.mxu0 0.0
        %2929 = vmatpush1.msra.mxu0 %v2894
        %2930 = vmatprep.subr.mxu0 0.0
        %2931 = vmatpush1.msra.mxu0 %v2895
        %2932 = vmatprep.subr.mxu0 0.0
        %2933 = vmatpush1.msra.mxu0 %v2896
        %2934 = vmatprep.subr.mxu0 0.0
        %2935 = vmatpush1.msra.mxu0 %v2897
        %2936 = vmatprep.subr.mxu0 0.0
        %2937 = vmatpush1.msra.mxu0 %v2898
        %2938 = vmatprep.subr.mxu0 0.0
        %2939 = vmatpush1.msra.mxu0 0.0
        %2940 = vmatprep.subr.mxu0 0.0
        %2941 = vmatpush1.msra.mxu0 0.0
        %2942 = vmatprep.subr.mxu0 0.0
        %2943 = vmatpush1.msra.mxu0 0.0
        %2944 = vmatprep.subr.mxu0 0.0
        %2945 = vmatpush1.msra.mxu0 0.0
        %2946 = vmatprep.subr.mxu0 0.0
        %2947 = vmatpush1.msra.mxu0 0.0
        %2948 = vmatprep.subr.mxu0 0.0
        %2949 = vmatpush1.msra.mxu0 0.0
        %2950 = vmatprep.subr.mxu0 0.0
        %2951 = vmatpush1.msra.mxu0 0.0
        %2952 = vmatprep.subr.mxu0 0.0
        %2953 = vmatpush1.msra.mxu0 0.0
        %2954 = vmatprep.subr.mxu0 0.0
        %2955 = vmatpush1.msra.mxu0 0.0
        %2956 = vmatprep.subr.mxu0 0.0
        %2957 = vmatpush1.msra.mxu0 0.0
        %2958 = vmatprep.subr.mxu0 0.0
        %2959 = vmatpush1.msra.mxu0 0.0
        %2960 = vmatprep.subr.mxu0 0.0
        %2961 = vmatpush1.msra.mxu0 0.0
        %2962 = vmatprep.subr.mxu0 0.0
        %2963 = vmatpush1.msra.mxu0 0.0
        %2964 = vmatprep.subr.mxu0 0.0
        %2965 = vmatpush1.msra.mxu0 0.0
        %2966 = vmatprep.subr.mxu0 0.0
        %2967 = vmatpush1.msra.mxu0 0.0
        %2968 = vmatprep.subr.mxu0 0.0
        %2969 = vmatpush1.msra.mxu0 0.0
        %2970 = vmatprep.mubr.f32.mxu0 0.0
        %2971 = vmatmul.mubr.f32.gmra.mrb[0].mxu0 %v2881
        %v2972 = vpop.f32.mrb[0].mxu0
        %v2973 = vadd.f32 %v2904, %v2972
        %v2974 = vpop.f32.mrb[0].mxu0
        %2975 = vmatprep.mubr.f32.mxu0 0.0
        %2976 = vmatmul.mubr.f32.gmra.mrb[0].mxu0 %v2882
        %v2977 = vpop.f32.mrb[0].mxu0
        %v2978 = vadd.f32 %v2904, %v2977
        %v2979 = vpop.f32.mrb[0].mxu0
        %2980 = vdwg.mxu0
        %2981 = vst [vmem:[%s610] sm:$0xff] %v2973
        %2982 = vst [vmem:[%s610 + $0x8] sm:$0xff] %v2978
        %s2983 = sand.u32 %s332, 1
        %s2984 = scalar_lea.sflag [#allocation4], %s2983
        %s2985 = sand.u32 %s332, 1
        %s2986 = smul.addr %s2985, 16
        %s2987 = scalar_lea.vmem [#allocation14], %s2986
        // Predicated region
        $region97: #{tpu_custom_call.1} parent=67 // pred_check
          %p2988 = pneg %p342
        $region98: #{tpu_custom_call.1} parent=67 // pred_check_branch
          %2990 = sbr.rel (%p2988) target = $region100
        $region99: #{tpu_custom_call.1} parent=67 // pred_region
          %s2991 = smul.u32 2, %s39
          %s2993 = ssub.s32 256, 256
          %2994 = vsyncadd %s2984, %s2993
          %s2995 = smul.addr %s38, 2
          %s2996 = sadd.s32 %s2991, %s2995
          %s2997 = smul.addr %s2996, 128
          %s2998 = scalar_lea.hbm %s12, %s2997
          %s2999 = sshll.u32 %s2987, 4
          %s3000 = int_to_ptr.vmem [resolvable:$true] %s2999
          %3005 = dma.vmem_to_hbm [thread:$0]  %s3000, 256, %s2998, %s2984, 128, 128, 8
        $region100: #{tpu_custom_call.1} parent=67 // pred_fallthru
          _
      $region68: #{tpu_custom_call.1} parent=5 // pred_fallthru
        _
      %p3006 = scmp.le.s32.totalorder 2, %s29
      // Predicated region
      $region101: #{tpu_custom_call.1} parent=5 // pred_check
        %p3007 = pneg %p3006
      $region102: #{tpu_custom_call.1} parent=5 // pred_check_branch
        %3009 = sbr.rel (%p3007) target = $region104
      $region103: #{tpu_custom_call.1} parent=5 // pred_region
        %s3010 = ssub.s32 %s29, 2
        // Predicated region
        $region105: #{tpu_custom_call.1} parent=103 // pred_check
          %p3011 = pneg %p348
        $region106: #{tpu_custom_call.1} parent=103 // pred_check_branch
          %3013 = sbr.rel (%p3011) target = $region108
        $region107: #{tpu_custom_call.1} parent=103 // pred_region
          %s3014 = sand.u32 %s333, 1
          %s3015 = scalar_lea.sflag [#allocation4], %s3014
          %s3016 = sand.u32 %s333, 1
          %s3017 = smul.addr %s3016, 16
          %s3018 = scalar_lea.vmem [#allocation14], %s3017
          %3019 = dma.done %s3015, 256
        $region108: #{tpu_custom_call.1} parent=103 // pred_fallthru
          _
      $region104: #{tpu_custom_call.1} parent=5 // pred_fallthru
        _
    $region6: #{tpu_custom_call.1} parent=1 // loop_footer
      %s33 = sadd.s32 1, %s29
    $region7: #{tpu_custom_call.1} parent=1 // loop_footer_branch
      %28 = sbr.rel target = $region3
    $region8: #{tpu_custom_call.1} parent=1 // loop_exit
      _
    %3020 = vsyncpa [#allocation3], 1
    %s3021 = scalar_lea.sflag [#allocation3], 1
    %3022 = vsyncpa %s3021, 1
    %3023 = vsyncpa [#allocation6], 1
    %s3024 = scalar_lea.sflag [#allocation6], 1
    %3025 = vsyncpa %s3024, 1
    %3026 = vsyncpa [#allocation9], 1
    %3027 = vsyncpa [#allocation12], 1
    %3028 = vsyncpa [#allocation4], 1
    %s3029 = scalar_lea.sflag [#allocation4], 1
    %3030 = vsyncpa %s3029, 1

</llo_original>
